<compile_context>
chip_gen: v7x
topology: tpu7x:2x2x1
jax: 0.10.0
libtpu: 0.0.40
codegen_flags: <defaults>
</compile_context>

<pallas_src>
import jax
import jax.numpy as jnp
from jax.experimental import pallas as pl
from jax.experimental.pallas import tpu as pltpu

LATENT_DIM = 5
LATENT_PAD = 128            # latent padded to one full 128-lane tile
IMG_FLAT = 28 * 28          # 784
IMG_PAD = 896               # 7 * 128 -> lane-dense feature dimension
HIDDEN = 256


def _round_up(n, m):
    return ((n + m - 1) // m) * m


def _vae_kernel(x_ref, eps_ref,
                w1_ref, b1_ref, w2_ref, b2_ref,
                wml_ref, bml_ref,
                wd0_ref, bd0_ref, wd1_ref, bd1_ref, wd2_ref, bd2_ref,
                recon_ref, mu_ref, logvar_ref):
    x = x_ref[...]                                               # (TB, 896) bf16

    # ---- encoder ----
    h = jnp.dot(x, w1_ref[...], preferred_element_type=jnp.float32) + b1_ref[...]
    h = jnp.maximum(h, 0.0).astype(jnp.bfloat16)
    h = jnp.dot(h, w2_ref[...], preferred_element_type=jnp.float32) + b2_ref[...]
    h = jnp.maximum(h, 0.0).astype(jnp.bfloat16)                 # (TB, 256)

    # fused mu || logvar head: (TB, 256) @ (256, 256) -> [mu_pad | logvar_pad]
    ml = jnp.dot(h, wml_ref[...], preferred_element_type=jnp.float32) + bml_ref[...]
    mu = ml[:, :LATENT_PAD]
    logvar = ml[:, LATENT_PAD:]
    mu_ref[...] = mu
    logvar_ref[...] = logvar                                     # (TB, 128) each

    # ---- reparameterize (padded lanes: mu=logvar=eps=0 -> z=0 there) ----
    std = jnp.exp(0.5 * logvar)
    z = (mu + eps_ref[...] * std).astype(jnp.bfloat16)           # (TB, 128)

    # ---- decoder ----
    d = jnp.dot(z, wd0_ref[...], preferred_element_type=jnp.float32) + bd0_ref[...]
    d = d.astype(jnp.bfloat16)
    d = jnp.dot(d, wd1_ref[...], preferred_element_type=jnp.float32) + bd1_ref[...]
    d = jnp.maximum(d, 0.0).astype(jnp.bfloat16)
    d = jnp.dot(d, wd2_ref[...], preferred_element_type=jnp.float32) + bd2_ref[...]
    recon_ref[...] = jax.nn.sigmoid(d)                           # (TB, 896) f32


def _linear_init(key, fan_in, fan_out):
    """PyTorch nn.Linear default init: U(-1/sqrt(fan_in), 1/sqrt(fan_in)).
    Weight stored as (in_features, out_features) so kernel does x @ W + b."""
    kw, kb = jax.random.split(key)
    bound = 1.0 / jnp.sqrt(jnp.float32(fan_in))
    w = jax.random.uniform(kw, (fan_in, fan_out), jnp.float32, -bound, bound)
    b = jax.random.uniform(kb, (1, fan_out), jnp.float32, -bound, bound)
    return w, b


def make_params(key):
    keys = jax.random.split(key, 7)
    w1, b1 = _linear_init(keys[0], IMG_FLAT, HIDDEN)        # encoder Linear(784,256)
    w2, b2 = _linear_init(keys[1], HIDDEN, HIDDEN)          # encoder Linear(256,256)
    wmu, bmu = _linear_init(keys[2], HIDDEN, LATENT_DIM)    # fc_mu
    wlv, blv = _linear_init(keys[3], HIDDEN, LATENT_DIM)    # fc_logvar
    wd0, bd0 = _linear_init(keys[4], LATENT_DIM, HIDDEN)    # decoder_input
    wd1, bd1 = _linear_init(keys[5], HIDDEN, HIDDEN)        # decoder Linear(256,256)
    wd2, bd2 = _linear_init(keys[6], HIDDEN, IMG_FLAT)      # decoder Linear(256,784)
    return (w1, b1, w2, b2, wmu, bmu, wlv, blv,
            wd0, bd0, wd1, bd1, wd2, bd2)


def prepare_params(params):
    """Zero-pad to lane-dense shapes, fuse mu/logvar heads, cast weights to bf16."""
    (w1, b1, w2, b2, wmu, bmu, wlv, blv,
     wd0, bd0, wd1, bd1, wd2, bd2) = params
    f32, bf16 = jnp.float32, jnp.bfloat16

    # Linear(784 -> 256): pad input-feature rows 784 -> 896 with zeros.
    w1_p = jnp.zeros((IMG_PAD, HIDDEN), f32).at[:IMG_FLAT].set(w1).astype(bf16)

    # Fused mu/logvar head: each (256, 5) zero-padded to (256, 128), concatenated.
    wmu_p = jnp.zeros((HIDDEN, LATENT_PAD), f32).at[:, :LATENT_DIM].set(wmu)
    wlv_p = jnp.zeros((HIDDEN, LATENT_PAD), f32).at[:, :LATENT_DIM].set(wlv)
    wml = jnp.concatenate([wmu_p, wlv_p], axis=1).astype(bf16)          # (256, 256)
    bmu_p = jnp.zeros((1, LATENT_PAD), f32).at[:, :LATENT_DIM].set(bmu)
    blv_p = jnp.zeros((1, LATENT_PAD), f32).at[:, :LATENT_DIM].set(blv)
    bml = jnp.concatenate([bmu_p, blv_p], axis=1)                       # (1, 256)

    # decoder_input Linear(5 -> 256): pad latent rows 5 -> 128 with zeros.
    wd0_p = jnp.zeros((LATENT_PAD, HIDDEN), f32).at[:LATENT_DIM].set(wd0).astype(bf16)

    # decoder Linear(256 -> 784): pad output columns 784 -> 896 with zeros.
    wd2_p = jnp.zeros((HIDDEN, IMG_PAD), f32).at[:, :IMG_FLAT].set(wd2).astype(bf16)
    bd2_p = jnp.zeros((1, IMG_PAD), f32).at[:, :IMG_FLAT].set(bd2)

    return (w1_p, b1, w2.astype(bf16), b2, wml, bml,
            wd0_p, bd0, wd1.astype(bf16), bd1, wd2_p, bd2_p)


@jax.jit
def linear_vae_forward(x_nchw, eps, padded_params):
    """x_nchw: (B, 1, 28, 28) float32, eps: (B, LATENT_DIM) float32."""
    B = x_nchw.shape[0]
    TB = min(256, _round_up(max(B, 1), 8))     # batch tile (mult. of 8 sublanes)
    B_pad = _round_up(B, TB)
    n_tiles = B_pad // TB

    # Zero-pad inputs to lane/sublane-dense shapes (zeros keep math identical).
    x_flat = x_nchw.reshape(B, IMG_FLAT)
    x_p = jnp.zeros((B_pad, IMG_PAD), jnp.bfloat16)
    x_p = x_p.at[:B, :IMG_FLAT].set(x_flat.astype(jnp.bfloat16))
    eps_p = jnp.zeros((B_pad, LATENT_PAD), jnp.float32)
    eps_p = eps_p.at[:B, :LATENT_DIM].set(eps)

    (w1, b1, w2, b2, wml, bml, wd0, bd0, wd1, bd1, wd2, bd2) = padded_params
    weights = (w1, b1, w2, b2, wml, bml, wd0, bd0, wd1, bd1, wd2, bd2)

    def row_spec(width):
        return pl.BlockSpec((TB, width), lambda i: (i, 0))

    def resident_spec(arr):
        # Full-array block with constant index -> stays resident in VMEM.
        return pl.BlockSpec(arr.shape, lambda i: (0, 0))

    in_specs = [row_spec(IMG_PAD), row_spec(LATENT_PAD)] + \
               [resident_spec(w) for w in weights]
    out_specs = (row_spec(IMG_PAD), row_spec(LATENT_PAD), row_spec(LATENT_PAD))
    out_shapes = (
        jax.ShapeDtypeStruct((B_pad, IMG_PAD), jnp.float32),     # recon (padded)
        jax.ShapeDtypeStruct((B_pad, LATENT_PAD), jnp.float32),  # mu (padded)
        jax.ShapeDtypeStruct((B_pad, LATENT_PAD), jnp.float32),  # logvar (padded)
    )

    matmul_flops = 2 * B_pad * (
        IMG_PAD * HIDDEN + HIDDEN * HIDDEN + HIDDEN * (2 * LATENT_PAD)
        + LATENT_PAD * HIDDEN + HIDDEN * HIDDEN + HIDDEN * IMG_PAD)
    weight_bytes = sum(int(w.size) * w.dtype.itemsize for w in weights)
    io_bytes = (B_pad * IMG_PAD * 2 + B_pad * LATENT_PAD * 4          # x, eps in
                + B_pad * IMG_PAD * 4 + 2 * B_pad * LATENT_PAD * 4)   # outputs
    cost = pl.CostEstimate(
        flops=int(matmul_flops),
        transcendentals=int(B_pad * (IMG_PAD + 2 * LATENT_PAD)),
        bytes_accessed=int(weight_bytes + io_bytes))

    recon_p, mu_p, logvar_p = pl.pallas_call(
        _vae_kernel,
        out_shape=out_shapes,
        grid=(n_tiles,),
        in_specs=in_specs,
        out_specs=out_specs,
        compiler_params=pltpu.CompilerParams(
            dimension_semantics=("parallel",),   # megacore batch sharding (v7x)
            vmem_limit_bytes=32 << 20),          # right-sized; < 64 MiB v7x VMEM
        cost_estimate=cost,
    )(x_p, eps_p, *weights)

    recon = recon_p[:B, :IMG_FLAT].reshape(B, 1, 28, 28)   # nn.Unflatten(1,(1,28,28))
    mu = mu_p[:B, :LATENT_DIM]
    logvar = logvar_p[:B, :LATENT_DIM]
    return recon, mu, logvar


if __name__ == "__main__":
    key = jax.random.PRNGKey(0)
    k_params, k_x, k_eps = jax.random.split(key, 3)

    B = 2
    params = make_params(k_params)
    padded_params = prepare_params(params)

    # image-like inputs in [0, 1], NCHW
    x = jax.random.uniform(k_x, (B, 1, 28, 28), jnp.float32)
    # eps for the reparameterization trick (torch.randn_like equivalent)
    eps = jax.random.normal(k_eps, (B, LATENT_DIM), jnp.float32)

    recon, mu, logvar = linear_vae_forward(x, eps, padded_params)
    jax.block_until_ready((recon, mu, logvar))

    assert recon.shape == (B, 1, 28, 28)
    assert mu.shape == (B, LATENT_DIM)
    assert logvar.shape == (B, LATENT_DIM)
    assert bool(jnp.all((recon >= 0.0) & (recon <= 1.0)))
    assert bool(jnp.all(jnp.isfinite(mu))) and bool(jnp.all(jnp.isfinite(logvar)))

    print("KERNEL_OK")
</pallas_src>

<mosaic_0001>
module attributes {stable_mosaic.version = 11 : i64} {
  func.func @_vae_kernel(%arg0: i32, %arg1: memref<8x896xbf16, #tpu.memory_space<vmem>>, %arg2: memref<8x128xf32, #tpu.memory_space<vmem>>, %arg3: memref<896x256xbf16, #tpu.memory_space<vmem>>, %arg4: memref<1x256xf32, #tpu.memory_space<vmem>>, %arg5: memref<256x256xbf16, #tpu.memory_space<vmem>>, %arg6: memref<1x256xf32, #tpu.memory_space<vmem>>, %arg7: memref<256x256xbf16, #tpu.memory_space<vmem>>, %arg8: memref<1x256xf32, #tpu.memory_space<vmem>>, %arg9: memref<128x256xbf16, #tpu.memory_space<vmem>>, %arg10: memref<1x256xf32, #tpu.memory_space<vmem>>, %arg11: memref<256x256xbf16, #tpu.memory_space<vmem>>, %arg12: memref<1x256xf32, #tpu.memory_space<vmem>>, %arg13: memref<256x896xbf16, #tpu.memory_space<vmem>>, %arg14: memref<1x896xf32, #tpu.memory_space<vmem>>, %arg15: memref<8x896xf32, #tpu.memory_space<vmem>>, %arg16: memref<8x128xf32, #tpu.memory_space<vmem>>, %arg17: memref<8x128xf32, #tpu.memory_space<vmem>>) attributes {dimension_semantics = [#tpu.dimension_semantics<parallel>], iteration_bounds = array<i64: 1>, scalar_prefetch = 0 : i64, scratch_operands = 0 : i64, tpu.core_type = #tpu.core_type<tc>, window_params = [{transform_indices = @transform_0, window_bounds = array<i64: 8, 896>}, {transform_indices = @transform_1, window_bounds = array<i64: 8, 128>}, {pipeline_mode = #tpu.pipeline_mode<synchronous>, transform_indices = @transform_2, window_bounds = array<i64: 896, 256>}, {pipeline_mode = #tpu.pipeline_mode<synchronous>, transform_indices = @transform_3, window_bounds = array<i64: 1, 256>}, {pipeline_mode = #tpu.pipeline_mode<synchronous>, transform_indices = @transform_4, window_bounds = array<i64: 256, 256>}, {pipeline_mode = #tpu.pipeline_mode<synchronous>, transform_indices = @transform_5, window_bounds = array<i64: 1, 256>}, {pipeline_mode = #tpu.pipeline_mode<synchronous>, transform_indices = @transform_6, window_bounds = array<i64: 256, 256>}, {pipeline_mode = #tpu.pipeline_mode<synchronous>, transform_indices = @transform_7, window_bounds = array<i64: 1, 256>}, {pipeline_mode = #tpu.pipeline_mode<synchronous>, transform_indices = @transform_8, window_bounds = array<i64: 128, 256>}, {pipeline_mode = #tpu.pipeline_mode<synchronous>, transform_indices = @transform_9, window_bounds = array<i64: 1, 256>}, {pipeline_mode = #tpu.pipeline_mode<synchronous>, transform_indices = @transform_10, window_bounds = array<i64: 256, 256>}, {pipeline_mode = #tpu.pipeline_mode<synchronous>, transform_indices = @transform_11, window_bounds = array<i64: 1, 256>}, {pipeline_mode = #tpu.pipeline_mode<synchronous>, transform_indices = @transform_12, window_bounds = array<i64: 256, 896>}, {pipeline_mode = #tpu.pipeline_mode<synchronous>, transform_indices = @transform_13, window_bounds = array<i64: 1, 896>}, {transform_indices = @transform_14, window_bounds = array<i64: 8, 896>}, {transform_indices = @transform_15, window_bounds = array<i64: 8, 128>}, {transform_indices = @transform_16, window_bounds = array<i64: 8, 128>}]} {
    %c0 = arith.constant 0 : index
    %c0_0 = arith.constant 0 : index
    %0 = vector.load %arg1[%c0, %c0_0] : memref<8x896xbf16, #tpu.memory_space<vmem>>, vector<8x896xbf16>
    %c0_1 = arith.constant 0 : index
    %c0_2 = arith.constant 0 : index
    %1 = vector.load %arg3[%c0_1, %c0_2] : memref<896x256xbf16, #tpu.memory_space<vmem>>, vector<896x256xbf16>
    %cst = arith.constant dense<0.000000e+00> : vector<8x256xf32>
    %2 = tpu.matmul %0, %1, %cst {dimension_numbers = #tpu.dot_dimension_numbers<[1], [0], [0], [1], [0, 0, 1, 1], [], []>} : vector<8x896xbf16>, vector<896x256xbf16>, vector<8x256xf32> -> vector<8x256xf32>
    %c0_3 = arith.constant 0 : index
    %c0_4 = arith.constant 0 : index
    %3 = vector.load %arg4[%c0_3, %c0_4] : memref<1x256xf32, #tpu.memory_space<vmem>>, vector<1x256xf32>
    %4 = vector.broadcast %3 : vector<1x256xf32> to vector<8x256xf32>
    %5 = arith.addf %2, %4 : vector<8x256xf32>
    %cst_5 = arith.constant 0.000000e+00 : f32
    %6 = vector.broadcast %cst_5 : f32 to vector<8x256xf32>
    %7 = arith.maximumf %5, %6 : vector<8x256xf32>
    %8 = arith.truncf %7 : vector<8x256xf32> to vector<8x256xbf16>
    %c0_6 = arith.constant 0 : index
    %c0_7 = arith.constant 0 : index
    %9 = vector.load %arg5[%c0_6, %c0_7] : memref<256x256xbf16, #tpu.memory_space<vmem>>, vector<256x256xbf16>
    %cst_8 = arith.constant dense<0.000000e+00> : vector<8x256xf32>
    %10 = tpu.matmul %8, %9, %cst_8 {dimension_numbers = #tpu.dot_dimension_numbers<[1], [0], [0], [1], [0, 0, 1, 1], [], []>} : vector<8x256xbf16>, vector<256x256xbf16>, vector<8x256xf32> -> vector<8x256xf32>
    %c0_9 = arith.constant 0 : index
    %c0_10 = arith.constant 0 : index
    %11 = vector.load %arg6[%c0_9, %c0_10] : memref<1x256xf32, #tpu.memory_space<vmem>>, vector<1x256xf32>
    %12 = vector.broadcast %11 : vector<1x256xf32> to vector<8x256xf32>
    %13 = arith.addf %10, %12 : vector<8x256xf32>
    %cst_11 = arith.constant 0.000000e+00 : f32
    %14 = vector.broadcast %cst_11 : f32 to vector<8x256xf32>
    %15 = arith.maximumf %13, %14 : vector<8x256xf32>
    %16 = arith.truncf %15 : vector<8x256xf32> to vector<8x256xbf16>
    %c0_12 = arith.constant 0 : index
    %c0_13 = arith.constant 0 : index
    %17 = vector.load %arg7[%c0_12, %c0_13] : memref<256x256xbf16, #tpu.memory_space<vmem>>, vector<256x256xbf16>
    %cst_14 = arith.constant dense<0.000000e+00> : vector<8x256xf32>
    %18 = tpu.matmul %16, %17, %cst_14 {dimension_numbers = #tpu.dot_dimension_numbers<[1], [0], [0], [1], [0, 0, 1, 1], [], []>} : vector<8x256xbf16>, vector<256x256xbf16>, vector<8x256xf32> -> vector<8x256xf32>
    %c0_15 = arith.constant 0 : index
    %c0_16 = arith.constant 0 : index
    %19 = vector.load %arg8[%c0_15, %c0_16] : memref<1x256xf32, #tpu.memory_space<vmem>>, vector<1x256xf32>
    %20 = vector.broadcast %19 : vector<1x256xf32> to vector<8x256xf32>
    %21 = arith.addf %18, %20 : vector<8x256xf32>
    %22 = vector.extract_strided_slice %21 {offsets = [0, 0], sizes = [8, 128], strides = [1, 1]} : vector<8x256xf32> to vector<8x128xf32>
    %23 = vector.extract_strided_slice %21 {offsets = [0, 128], sizes = [8, 128], strides = [1, 1]} : vector<8x256xf32> to vector<8x128xf32>
    %c0_17 = arith.constant 0 : index
    %c0_18 = arith.constant 0 : index
    %24 = vector.load %arg16[%c0_17, %c0_18] : memref<8x128xf32, #tpu.memory_space<vmem>>, vector<8x128xf32>
    tpu.vector_store %arg16[%c0_17, %c0_18], %22 {strides = array<i32>} : memref<8x128xf32, #tpu.memory_space<vmem>>, vector<8x128xf32>,
    %c0_19 = arith.constant 0 : index
    %c0_20 = arith.constant 0 : index
    %25 = vector.load %arg17[%c0_19, %c0_20] : memref<8x128xf32, #tpu.memory_space<vmem>>, vector<8x128xf32>
    tpu.vector_store %arg17[%c0_19, %c0_20], %23 {strides = array<i32>} : memref<8x128xf32, #tpu.memory_space<vmem>>, vector<8x128xf32>,
    %cst_21 = arith.constant 5.000000e-01 : f32
    %26 = vector.broadcast %cst_21 : f32 to vector<8x128xf32>
    %27 = arith.mulf %26, %23 : vector<8x128xf32>
    %28 = math.exp %27 : vector<8x128xf32>
    %c0_22 = arith.constant 0 : index
    %c0_23 = arith.constant 0 : index
    %29 = vector.load %arg2[%c0_22, %c0_23] : memref<8x128xf32, #tpu.memory_space<vmem>>, vector<8x128xf32>
    %30 = arith.mulf %29, %28 : vector<8x128xf32>
    %31 = arith.addf %22, %30 : vector<8x128xf32>
    %32 = arith.truncf %31 : vector<8x128xf32> to vector<8x128xbf16>
    %c0_24 = arith.constant 0 : index
    %c0_25 = arith.constant 0 : index
    %33 = vector.load %arg9[%c0_24, %c0_25] : memref<128x256xbf16, #tpu.memory_space<vmem>>, vector<128x256xbf16>
    %cst_26 = arith.constant dense<0.000000e+00> : vector<8x256xf32>
    %34 = tpu.matmul %32, %33, %cst_26 {dimension_numbers = #tpu.dot_dimension_numbers<[1], [0], [0], [1], [0, 0, 1, 1], [], []>} : vector<8x128xbf16>, vector<128x256xbf16>, vector<8x256xf32> -> vector<8x256xf32>
    %c0_27 = arith.constant 0 : index
    %c0_28 = arith.constant 0 : index
    %35 = vector.load %arg10[%c0_27, %c0_28] : memref<1x256xf32, #tpu.memory_space<vmem>>, vector<1x256xf32>
    %36 = vector.broadcast %35 : vector<1x256xf32> to vector<8x256xf32>
    %37 = arith.addf %34, %36 : vector<8x256xf32>
    %38 = arith.truncf %37 : vector<8x256xf32> to vector<8x256xbf16>
    %c0_29 = arith.constant 0 : index
    %c0_30 = arith.constant 0 : index
    %39 = vector.load %arg11[%c0_29, %c0_30] : memref<256x256xbf16, #tpu.memory_space<vmem>>, vector<256x256xbf16>
    %cst_31 = arith.constant dense<0.000000e+00> : vector<8x256xf32>
    %40 = tpu.matmul %38, %39, %cst_31 {dimension_numbers = #tpu.dot_dimension_numbers<[1], [0], [0], [1], [0, 0, 1, 1], [], []>} : vector<8x256xbf16>, vector<256x256xbf16>, vector<8x256xf32> -> vector<8x256xf32>
    %c0_32 = arith.constant 0 : index
    %c0_33 = arith.constant 0 : index
    %41 = vector.load %arg12[%c0_32, %c0_33] : memref<1x256xf32, #tpu.memory_space<vmem>>, vector<1x256xf32>
    %42 = vector.broadcast %41 : vector<1x256xf32> to vector<8x256xf32>
    %43 = arith.addf %40, %42 : vector<8x256xf32>
    %cst_34 = arith.constant 0.000000e+00 : f32
    %44 = vector.broadcast %cst_34 : f32 to vector<8x256xf32>
    %45 = arith.maximumf %43, %44 : vector<8x256xf32>
    %46 = arith.truncf %45 : vector<8x256xf32> to vector<8x256xbf16>
    %c0_35 = arith.constant 0 : index
    %c0_36 = arith.constant 0 : index
    %47 = vector.load %arg13[%c0_35, %c0_36] : memref<256x896xbf16, #tpu.memory_space<vmem>>, vector<256x896xbf16>
    %cst_37 = arith.constant dense<0.000000e+00> : vector<8x896xf32>
    %48 = tpu.matmul %46, %47, %cst_37 {dimension_numbers = #tpu.dot_dimension_numbers<[1], [0], [0], [1], [0, 0, 1, 1], [], []>} : vector<8x256xbf16>, vector<256x896xbf16>, vector<8x896xf32> -> vector<8x896xf32>
    %c0_38 = arith.constant 0 : index
    %c0_39 = arith.constant 0 : index
    %49 = vector.load %arg14[%c0_38, %c0_39] : memref<1x896xf32, #tpu.memory_space<vmem>>, vector<1x896xf32>
    %50 = vector.broadcast %49 : vector<1x896xf32> to vector<8x896xf32>
    %51 = arith.addf %48, %50 : vector<8x896xf32>
    %52 = arith.negf %51 : vector<8x896xf32>
    %53 = math.exp %52 : vector<8x896xf32>
    %cst_40 = arith.constant 1.000000e+00 : f32
    %54 = vector.broadcast %cst_40 : f32 to vector<8x896xf32>
    %55 = arith.addf %54, %53 : vector<8x896xf32>
    %56 = arith.divf %54, %55 : vector<8x896xf32>
    %c0_41 = arith.constant 0 : index
    %c0_42 = arith.constant 0 : index
    %57 = vector.load %arg15[%c0_41, %c0_42] : memref<8x896xf32, #tpu.memory_space<vmem>>, vector<8x896xf32>
    tpu.vector_store %arg15[%c0_41, %c0_42], %56 {strides = array<i32>} : memref<8x896xf32, #tpu.memory_space<vmem>>, vector<8x896xf32>,
    return
  }
  func.func @transform_0(%arg0: i32) -> (i32, i32) {
    %c0_i32 = arith.constant 0 : i32
    %c0_i32_0 = arith.constant 0 : i32
    return %arg0, %c0_i32 : i32, i32
  }
  func.func @transform_1(%arg0: i32) -> (i32, i32) {
    %c0_i32 = arith.constant 0 : i32
    %c0_i32_0 = arith.constant 0 : i32
    return %arg0, %c0_i32 : i32, i32
  }
  func.func @transform_2(%arg0: i32) -> (i32, i32) {
    %c0_i32 = arith.constant 0 : i32
    %c0_i32_0 = arith.constant 0 : i32
    %c0_i32_1 = arith.constant 0 : i32
    return %c0_i32, %c0_i32_0 : i32, i32
  }
  func.func @transform_3(%arg0: i32) -> (i32, i32) {
    %c0_i32 = arith.constant 0 : i32
    %c0_i32_0 = arith.constant 0 : i32
    %c0_i32_1 = arith.constant 0 : i32
    return %c0_i32, %c0_i32_0 : i32, i32
  }
  func.func @transform_4(%arg0: i32) -> (i32, i32) {
    %c0_i32 = arith.constant 0 : i32
    %c0_i32_0 = arith.constant 0 : i32
    %c0_i32_1 = arith.constant 0 : i32
    return %c0_i32, %c0_i32_0 : i32, i32
  }
  func.func @transform_5(%arg0: i32) -> (i32, i32) {
    %c0_i32 = arith.constant 0 : i32
    %c0_i32_0 = arith.constant 0 : i32
    %c0_i32_1 = arith.constant 0 : i32
    return %c0_i32, %c0_i32_0 : i32, i32
  }
  func.func @transform_6(%arg0: i32) -> (i32, i32) {
    %c0_i32 = arith.constant 0 : i32
    %c0_i32_0 = arith.constant 0 : i32
    %c0_i32_1 = arith.constant 0 : i32
    return %c0_i32, %c0_i32_0 : i32, i32
  }
  func.func @transform_7(%arg0: i32) -> (i32, i32) {
    %c0_i32 = arith.constant 0 : i32
    %c0_i32_0 = arith.constant 0 : i32
    %c0_i32_1 = arith.constant 0 : i32
    return %c0_i32, %c0_i32_0 : i32, i32
  }
  func.func @transform_8(%arg0: i32) -> (i32, i32) {
    %c0_i32 = arith.constant 0 : i32
    %c0_i32_0 = arith.constant 0 : i32
    %c0_i32_1 = arith.constant 0 : i32
    return %c0_i32, %c0_i32_0 : i32, i32
  }
  func.func @transform_9(%arg0: i32) -> (i32, i32) {
    %c0_i32 = arith.constant 0 : i32
    %c0_i32_0 = arith.constant 0 : i32
    %c0_i32_1 = arith.constant 0 : i32
    return %c0_i32, %c0_i32_0 : i32, i32
  }
  func.func @transform_10(%arg0: i32) -> (i32, i32) {
    %c0_i32 = arith.constant 0 : i32
    %c0_i32_0 = arith.constant 0 : i32
    %c0_i32_1 = arith.constant 0 : i32
    return %c0_i32, %c0_i32_0 : i32, i32
  }
  func.func @transform_11(%arg0: i32) -> (i32, i32) {
    %c0_i32 = arith.constant 0 : i32
    %c0_i32_0 = arith.constant 0 : i32
    %c0_i32_1 = arith.constant 0 : i32
    return %c0_i32, %c0_i32_0 : i32, i32
  }
  func.func @transform_12(%arg0: i32) -> (i32, i32) {
    %c0_i32 = arith.constant 0 : i32
    %c0_i32_0 = arith.constant 0 : i32
    %c0_i32_1 = arith.constant 0 : i32
    return %c0_i32, %c0_i32_0 : i32, i32
  }
  func.func @transform_13(%arg0: i32) -> (i32, i32) {
    %c0_i32 = arith.constant 0 : i32
    %c0_i32_0 = arith.constant 0 : i32
    %c0_i32_1 = arith.constant 0 : i32
    return %c0_i32, %c0_i32_0 : i32, i32
  }
  func.func @transform_14(%arg0: i32) -> (i32, i32) {
    %c0_i32 = arith.constant 0 : i32
    %c0_i32_0 = arith.constant 0 : i32
    return %arg0, %c0_i32 : i32, i32
  }
  func.func @transform_15(%arg0: i32) -> (i32, i32) {
    %c0_i32 = arith.constant 0 : i32
    %c0_i32_0 = arith.constant 0 : i32
    return %arg0, %c0_i32 : i32, i32
  }
  func.func @transform_16(%arg0: i32) -> (i32, i32) {
    %c0_i32 = arith.constant 0 : i32
    %c0_i32_0 = arith.constant 0 : i32
    return %arg0, %c0_i32 : i32, i32
  }
}

</mosaic_0001>

<llo_original>
// kernel: linear_vae_forward.1
$region0: #{linear_vae_forward.1}
  #allocation0 [shape = 'u32[]', space=smem, size = 0x4, offset = 0x4, fixed_abs, tag = 'smem constant byte address 0x4 - core index']
  #allocation1 [shape = 'u32[144,128]{1,0:T(1,128)}', space=vmem, size = 0x12000, scoped, tag = 'internal scratch']
  %s0 = inlined_call_operand.vmem [shape: bf16[8,896], index: 0, kind: input, shape index: {}]
  %s1 = inlined_call_operand.vmem [shape: f32[8,128], index: 1, kind: input, shape index: {}]
  %s2 = inlined_call_operand.hbm [shape: bf16[896,256], index: 2, kind: input, shape index: {}]
  %s3 = inlined_call_operand.vmem [shape: f32[1,256], index: 3, kind: input, shape index: {}]
  %s4 = inlined_call_operand.hbm [shape: bf16[256,256], index: 4, kind: input, shape index: {}]
  %s5 = inlined_call_operand.vmem [shape: f32[1,256], index: 5, kind: input, shape index: {}]
  %s6 = inlined_call_operand.hbm [shape: bf16[256,256], index: 6, kind: input, shape index: {}]
  %s7 = inlined_call_operand.vmem [shape: f32[1,256], index: 7, kind: input, shape index: {}]
  %s8 = inlined_call_operand.vmem [shape: bf16[128,256], index: 8, kind: input, shape index: {}]
  %s9 = inlined_call_operand.vmem [shape: f32[1,256], index: 9, kind: input, shape index: {}]
  %s10 = inlined_call_operand.hbm [shape: bf16[256,256], index: 10, kind: input, shape index: {}]
  %s11 = inlined_call_operand.vmem [shape: f32[1,256], index: 11, kind: input, shape index: {}]
  %s12 = inlined_call_operand.hbm [shape: bf16[256,896], index: 12, kind: input, shape index: {}]
  %s13 = inlined_call_operand.vmem [shape: f32[1,896], index: 13, kind: input, shape index: {}]
  %s14 = inlined_call_operand.vmem [shape: f32[8,896], index: 14, kind: output, shape index: {0}]
  %s15 = inlined_call_operand.vmem [shape: f32[8,128], index: 15, kind: output, shape index: {1}]
  %s16 = inlined_call_operand.vmem [shape: f32[8,128], index: 16, kind: output, shape index: {2}]
  %17 = xla_tuple %s14, %s15, %s16
  %s18 = sld [smem:[#allocation0]]
  $region102: #{linear_vae_forward.1} parent=0
    _
  %s20 = ssub.s32 1, %s18
  %s21 = scalar_select 0, %s20, %s18
  $region1: #{linear_vae_forward.1} parent=0
    #allocation2 [shape = 'u8[458752]{0}', space=vmem, size = 0x70000, scoped, tag = 'input window, operand 2, single buffered']
    #allocation3 [shape = 's32[1]{0}', space=sflag, size = 0x4, scoped, tag = 'scoped memory for linear_vae_forward.1']
    #allocation4 [shape = 'u8[131072]{0}', space=vmem, size = 0x20000, scoped, tag = 'input window, operand 4, single buffered']
    #allocation5 [shape = 's32[1]{0}', space=sflag, size = 0x4, scoped, tag = 'scoped memory for linear_vae_forward.1']
    #allocation6 [shape = 'u8[131072]{0}', space=vmem, size = 0x20000, scoped, tag = 'input window, operand 6, single buffered']
    #allocation7 [shape = 'u8[131072]{0}', space=vmem, size = 0x20000, scoped, tag = 'input window, operand 10, single buffered']
    #allocation8 [shape = 's32[1]{0}', space=sflag, size = 0x4, scoped, tag = 'scoped memory for linear_vae_forward.1']
    #allocation9 [shape = 'u8[458752]{0}', space=vmem, size = 0x70000, scoped, tag = 'input window, operand 12, single buffered']
    %22 = vsyncpa [#allocation3], 0
    %23 = vsyncpa [#allocation5], 0
    %24 = vsyncpa [#allocation8], 0
    // Predicated region
    $region2: #{linear_vae_forward.1} parent=1 // pred_check
      _
    $region3: #{linear_vae_forward.1} parent=1 // pred_check_branch
      %26 = sbr.rel (0) target = $region5
    $region4: #{linear_vae_forward.1} parent=1 // pred_region
      _
    $region5: #{linear_vae_forward.1} parent=1 // pred_fallthru
      _
    // Predicated region
    $region6: #{linear_vae_forward.1} parent=1 // pred_check
      _
    $region7: #{linear_vae_forward.1} parent=1 // pred_check_branch
      %28 = sbr.rel (0) target = $region9
    $region8: #{linear_vae_forward.1} parent=1 // pred_region
      _
    $region9: #{linear_vae_forward.1} parent=1 // pred_fallthru
      _
    // Predicated region
    $region10: #{linear_vae_forward.1} parent=1 // pred_check
      _
    $region11: #{linear_vae_forward.1} parent=1 // pred_check_branch
      %30 = sbr.rel (0) target = $region13
    $region12: #{linear_vae_forward.1} parent=1 // pred_region
      %s32 = ssub.s32 14336, 14336
      %33 = vsyncadd [#allocation3], %s32
      %s34 = sshll.u32 [#allocation2], 4
      %s35 = int_to_ptr.vmem [resolvable:$true] %s34
      %40 = dma.hbm_to_vmem [thread:$0]  %s2, 14336, %s35, [#allocation3], 128, 128, 8
    $region13: #{linear_vae_forward.1} parent=1 // pred_fallthru
      _
    // Predicated region
    $region14: #{linear_vae_forward.1} parent=1 // pred_check
      _
    $region15: #{linear_vae_forward.1} parent=1 // pred_check_branch
      %42 = sbr.rel (0) target = $region17
    $region16: #{linear_vae_forward.1} parent=1 // pred_region
      _
    $region17: #{linear_vae_forward.1} parent=1 // pred_fallthru
      _
    // Predicated region
    $region18: #{linear_vae_forward.1} parent=1 // pred_check
      _
    $region19: #{linear_vae_forward.1} parent=1 // pred_check_branch
      %44 = sbr.rel (0) target = $region21
    $region20: #{linear_vae_forward.1} parent=1 // pred_region
      %s46 = ssub.s32 4096, 4096
      %47 = vsyncadd [#allocation5], %s46
      %s48 = sshll.u32 [#allocation4], 4
      %s49 = int_to_ptr.vmem [resolvable:$true] %s48
      %54 = dma.hbm_to_vmem [thread:$0]  %s4, 4096, %s49, [#allocation5], 128, 128, 8
    $region21: #{linear_vae_forward.1} parent=1 // pred_fallthru
      _
    // Predicated region
    $region22: #{linear_vae_forward.1} parent=1 // pred_check
      _
    $region23: #{linear_vae_forward.1} parent=1 // pred_check_branch
      %56 = sbr.rel (0) target = $region25
    $region24: #{linear_vae_forward.1} parent=1 // pred_region
      _
    $region25: #{linear_vae_forward.1} parent=1 // pred_fallthru
      _
    // Predicated region
    $region26: #{linear_vae_forward.1} parent=1 // pred_check
      _
    $region27: #{linear_vae_forward.1} parent=1 // pred_check_branch
      %58 = sbr.rel (0) target = $region29
    $region28: #{linear_vae_forward.1} parent=1 // pred_region
      %s60 = ssub.s32 4096, 4096
      %61 = vsyncadd [#allocation5], %s60
      %s62 = sshll.u32 [#allocation6], 4
      %s63 = int_to_ptr.vmem [resolvable:$true] %s62
      %68 = dma.hbm_to_vmem [thread:$0]  %s6, 4096, %s63, [#allocation5], 128, 128, 8
    $region29: #{linear_vae_forward.1} parent=1 // pred_fallthru
      _
    // Predicated region
    $region30: #{linear_vae_forward.1} parent=1 // pred_check
      _
    $region31: #{linear_vae_forward.1} parent=1 // pred_check_branch
      %70 = sbr.rel (0) target = $region33
    $region32: #{linear_vae_forward.1} parent=1 // pred_region
      _
    $region33: #{linear_vae_forward.1} parent=1 // pred_fallthru
      _
    // Predicated region
    $region34: #{linear_vae_forward.1} parent=1 // pred_check
      _
    $region35: #{linear_vae_forward.1} parent=1 // pred_check_branch
      %72 = sbr.rel (0) target = $region37
    $region36: #{linear_vae_forward.1} parent=1 // pred_region
      _
    $region37: #{linear_vae_forward.1} parent=1 // pred_fallthru
      _
    // Predicated region
    $region38: #{linear_vae_forward.1} parent=1 // pred_check
      _
    $region39: #{linear_vae_forward.1} parent=1 // pred_check_branch
      %74 = sbr.rel (0) target = $region41
    $region40: #{linear_vae_forward.1} parent=1 // pred_region
      _
    $region41: #{linear_vae_forward.1} parent=1 // pred_fallthru
      _
    // Predicated region
    $region42: #{linear_vae_forward.1} parent=1 // pred_check
      _
    $region43: #{linear_vae_forward.1} parent=1 // pred_check_branch
      %76 = sbr.rel (0) target = $region45
    $region44: #{linear_vae_forward.1} parent=1 // pred_region
      %s78 = ssub.s32 4096, 4096
      %79 = vsyncadd [#allocation8], %s78
      %s80 = sshll.u32 [#allocation7], 4
      %s81 = int_to_ptr.vmem [resolvable:$true] %s80
      %86 = dma.hbm_to_vmem [thread:$0]  %s10, 4096, %s81, [#allocation8], 128, 128, 8
    $region45: #{linear_vae_forward.1} parent=1 // pred_fallthru
      _
    // Predicated region
    $region46: #{linear_vae_forward.1} parent=1 // pred_check
      _
    $region47: #{linear_vae_forward.1} parent=1 // pred_check_branch
      %88 = sbr.rel (0) target = $region49
    $region48: #{linear_vae_forward.1} parent=1 // pred_region
      _
    $region49: #{linear_vae_forward.1} parent=1 // pred_fallthru
      _
    // Predicated region
    $region50: #{linear_vae_forward.1} parent=1 // pred_check
      _
    $region51: #{linear_vae_forward.1} parent=1 // pred_check_branch
      %90 = sbr.rel (0) target = $region53
    $region52: #{linear_vae_forward.1} parent=1 // pred_region
      %s92 = ssub.s32 14336, 14336
      %93 = vsyncadd [#allocation8], %s92
      %s94 = sshll.u32 [#allocation9], 4
      %s95 = int_to_ptr.vmem [resolvable:$true] %s94
      %100 = dma.hbm_to_vmem [thread:$0]  %s12, 14336, %s95, [#allocation8], 448, 448, 28
    $region53: #{linear_vae_forward.1} parent=1 // pred_fallthru
      _
    // Predicated region
    $region54: #{linear_vae_forward.1} parent=1 // pred_check
      _
    $region55: #{linear_vae_forward.1} parent=1 // pred_check_branch
      %102 = sbr.rel (0) target = $region57
    $region56: #{linear_vae_forward.1} parent=1 // pred_region
      _
    $region57: #{linear_vae_forward.1} parent=1 // pred_fallthru
      _
    // Predicated region
    $region58: #{linear_vae_forward.1} parent=1 // pred_check
      _
    $region59: #{linear_vae_forward.1} parent=1 // pred_check_branch
      %104 = sbr.rel (0) target = $region61
    $region60: #{linear_vae_forward.1} parent=1 // pred_region
      %105 = dma.done [#allocation3], 14336
    $region61: #{linear_vae_forward.1} parent=1 // pred_fallthru
      _
    // Predicated region
    $region62: #{linear_vae_forward.1} parent=1 // pred_check
      _
    $region63: #{linear_vae_forward.1} parent=1 // pred_check_branch
      %107 = sbr.rel (0) target = $region65
    $region64: #{linear_vae_forward.1} parent=1 // pred_region
      %108 = dma.done [#allocation5], 4096
    $region65: #{linear_vae_forward.1} parent=1 // pred_fallthru
      _
    // Predicated region
    $region66: #{linear_vae_forward.1} parent=1 // pred_check
      _
    $region67: #{linear_vae_forward.1} parent=1 // pred_check_branch
      %110 = sbr.rel (0) target = $region69
    $region68: #{linear_vae_forward.1} parent=1 // pred_region
      %111 = dma.done [#allocation5], 4096
    $region69: #{linear_vae_forward.1} parent=1 // pred_fallthru
      _
    // Predicated region
    $region70: #{linear_vae_forward.1} parent=1 // pred_check
      _
    $region71: #{linear_vae_forward.1} parent=1 // pred_check_branch
      %113 = sbr.rel (0) target = $region73
    $region72: #{linear_vae_forward.1} parent=1 // pred_region
      %114 = dma.done [#allocation8], 4096
    $region73: #{linear_vae_forward.1} parent=1 // pred_fallthru
      _
    // Predicated region
    $region74: #{linear_vae_forward.1} parent=1 // pred_check
      _
    $region75: #{linear_vae_forward.1} parent=1 // pred_check_branch
      %116 = sbr.rel (0) target = $region77
    $region76: #{linear_vae_forward.1} parent=1 // pred_region
      %117 = dma.done [#allocation8], 14336
    $region77: #{linear_vae_forward.1} parent=1 // pred_fallthru
      _
    %v119 = vld [vmem:[%s0] sm:$0xff]
    %v120 = vld [vmem:[%s0 + $0x8] sm:$0xff]
    %v121 = vld [vmem:[%s0 + $0x10] sm:$0xff]
    %v122 = vld [vmem:[%s0 + $0x18] sm:$0xf]
    %v123 = vld [vmem:[#allocation2] sm:$0xff]
    %v124 = vld [vmem:[#allocation2 + $0x8] sm:$0xff]
    %v125 = vld [vmem:[#allocation2 + $0x10] sm:$0xff]
    %v126 = vld [vmem:[#allocation2 + $0x18] sm:$0xff]
    %v127 = vld [vmem:[#allocation2 + $0x20] sm:$0xff]
    %v128 = vld [vmem:[#allocation2 + $0x28] sm:$0xff]
    %v129 = vld [vmem:[#allocation2 + $0x30] sm:$0xff]
    %v130 = vld [vmem:[#allocation2 + $0x38] sm:$0xff]
    %v131 = vld [vmem:[#allocation2 + $0x40] sm:$0xff]
    %v132 = vld [vmem:[#allocation2 + $0x48] sm:$0xff]
    %v133 = vld [vmem:[#allocation2 + $0x50] sm:$0xff]
    %v134 = vld [vmem:[#allocation2 + $0x58] sm:$0xff]
    %v135 = vld [vmem:[#allocation2 + $0x60] sm:$0xff]
    %v136 = vld [vmem:[#allocation2 + $0x68] sm:$0xff]
    %v137 = vld [vmem:[#allocation2 + $0x70] sm:$0xff]
    %v138 = vld [vmem:[#allocation2 + $0x78] sm:$0xff]
    %v139 = vld [vmem:[#allocation2 + $0x80] sm:$0xff]
    %v140 = vld [vmem:[#allocation2 + $0x88] sm:$0xff]
    %v141 = vld [vmem:[#allocation2 + $0x90] sm:$0xff]
    %v142 = vld [vmem:[#allocation2 + $0x98] sm:$0xff]
    %v143 = vld [vmem:[#allocation2 + $0xa0] sm:$0xff]
    %v144 = vld [vmem:[#allocation2 + $0xa8] sm:$0xff]
    %v145 = vld [vmem:[#allocation2 + $0xb0] sm:$0xff]
    %v146 = vld [vmem:[#allocation2 + $0xb8] sm:$0xff]
    %v147 = vld [vmem:[#allocation2 + $0xc0] sm:$0xff]
    %v148 = vld [vmem:[#allocation2 + $0xc8] sm:$0xff]
    %v149 = vld [vmem:[#allocation2 + $0xd0] sm:$0xff]
    %v150 = vld [vmem:[#allocation2 + $0xd8] sm:$0xff]
    %v151 = vld [vmem:[#allocation2 + $0xe0] sm:$0xff]
    %v152 = vld [vmem:[#allocation2 + $0xe8] sm:$0xff]
    %v153 = vld [vmem:[#allocation2 + $0xf0] sm:$0xff]
    %v154 = vld [vmem:[#allocation2 + $0xf8] sm:$0xff]
    %v155 = vld [vmem:[#allocation2 + $0x100] sm:$0xff]
    %v156 = vld [vmem:[#allocation2 + $0x108] sm:$0xff]
    %v157 = vld [vmem:[#allocation2 + $0x110] sm:$0xff]
    %v158 = vld [vmem:[#allocation2 + $0x118] sm:$0xff]
    %v159 = vld [vmem:[#allocation2 + $0x120] sm:$0xff]
    %v160 = vld [vmem:[#allocation2 + $0x128] sm:$0xff]
    %v161 = vld [vmem:[#allocation2 + $0x130] sm:$0xff]
    %v162 = vld [vmem:[#allocation2 + $0x138] sm:$0xff]
    %v163 = vld [vmem:[#allocation2 + $0x140] sm:$0xff]
    %v164 = vld [vmem:[#allocation2 + $0x148] sm:$0xff]
    %v165 = vld [vmem:[#allocation2 + $0x150] sm:$0xff]
    %v166 = vld [vmem:[#allocation2 + $0x158] sm:$0xff]
    %v167 = vld [vmem:[#allocation2 + $0x160] sm:$0xff]
    %v168 = vld [vmem:[#allocation2 + $0x168] sm:$0xff]
    %v169 = vld [vmem:[#allocation2 + $0x170] sm:$0xff]
    %v170 = vld [vmem:[#allocation2 + $0x178] sm:$0xff]
    %v171 = vld [vmem:[#allocation2 + $0x180] sm:$0xff]
    %v172 = vld [vmem:[#allocation2 + $0x188] sm:$0xff]
    %v173 = vld [vmem:[#allocation2 + $0x190] sm:$0xff]
    %v174 = vld [vmem:[#allocation2 + $0x198] sm:$0xff]
    %v175 = vld [vmem:[#allocation2 + $0x1a0] sm:$0xff]
    %v176 = vld [vmem:[#allocation2 + $0x1a8] sm:$0xff]
    %v177 = vld [vmem:[#allocation2 + $0x1b0] sm:$0xff]
    %v178 = vld [vmem:[#allocation2 + $0x1b8] sm:$0xff]
    %v179 = vld [vmem:[#allocation2 + $0x1c0] sm:$0xff]
    %v180 = vld [vmem:[#allocation2 + $0x1c8] sm:$0xff]
    %v181 = vld [vmem:[#allocation2 + $0x1d0] sm:$0xff]
    %v182 = vld [vmem:[#allocation2 + $0x1d8] sm:$0xff]
    %v183 = vld [vmem:[#allocation2 + $0x1e0] sm:$0xff]
    %v184 = vld [vmem:[#allocation2 + $0x1e8] sm:$0xff]
    %v185 = vld [vmem:[#allocation2 + $0x1f0] sm:$0xff]
    %v186 = vld [vmem:[#allocation2 + $0x1f8] sm:$0xff]
    %v187 = vld [vmem:[#allocation2 + $0x200] sm:$0xff]
    %v188 = vld [vmem:[#allocation2 + $0x208] sm:$0xff]
    %v189 = vld [vmem:[#allocation2 + $0x210] sm:$0xff]
    %v190 = vld [vmem:[#allocation2 + $0x218] sm:$0xff]
    %v191 = vld [vmem:[#allocation2 + $0x220] sm:$0xff]
    %v192 = vld [vmem:[#allocation2 + $0x228] sm:$0xff]
    %v193 = vld [vmem:[#allocation2 + $0x230] sm:$0xff]
    %v194 = vld [vmem:[#allocation2 + $0x238] sm:$0xff]
    %v195 = vld [vmem:[#allocation2 + $0x240] sm:$0xff]
    %v196 = vld [vmem:[#allocation2 + $0x248] sm:$0xff]
    %v197 = vld [vmem:[#allocation2 + $0x250] sm:$0xff]
    %v198 = vld [vmem:[#allocation2 + $0x258] sm:$0xff]
    %v199 = vld [vmem:[#allocation2 + $0x260] sm:$0xff]
    %v200 = vld [vmem:[#allocation2 + $0x268] sm:$0xff]
    %v201 = vld [vmem:[#allocation2 + $0x270] sm:$0xff]
    %v202 = vld [vmem:[#allocation2 + $0x278] sm:$0xff]
    %v203 = vld [vmem:[#allocation2 + $0x280] sm:$0xff]
    %v204 = vld [vmem:[#allocation2 + $0x288] sm:$0xff]
    %v205 = vld [vmem:[#allocation2 + $0x290] sm:$0xff]
    %v206 = vld [vmem:[#allocation2 + $0x298] sm:$0xff]
    %v207 = vld [vmem:[#allocation2 + $0x2a0] sm:$0xff]
    %v208 = vld [vmem:[#allocation2 + $0x2a8] sm:$0xff]
    %v209 = vld [vmem:[#allocation2 + $0x2b0] sm:$0xff]
    %v210 = vld [vmem:[#allocation2 + $0x2b8] sm:$0xff]
    %v211 = vld [vmem:[#allocation2 + $0x2c0] sm:$0xff]
    %v212 = vld [vmem:[#allocation2 + $0x2c8] sm:$0xff]
    %v213 = vld [vmem:[#allocation2 + $0x2d0] sm:$0xff]
    %v214 = vld [vmem:[#allocation2 + $0x2d8] sm:$0xff]
    %v215 = vld [vmem:[#allocation2 + $0x2e0] sm:$0xff]
    %v216 = vld [vmem:[#allocation2 + $0x2e8] sm:$0xff]
    %v217 = vld [vmem:[#allocation2 + $0x2f0] sm:$0xff]
    %v218 = vld [vmem:[#allocation2 + $0x2f8] sm:$0xff]
    %v219 = vld [vmem:[#allocation2 + $0x300] sm:$0xff]
    %v220 = vld [vmem:[#allocation2 + $0x308] sm:$0xff]
    %v221 = vld [vmem:[#allocation2 + $0x310] sm:$0xff]
    %v222 = vld [vmem:[#allocation2 + $0x318] sm:$0xff]
    %v223 = vld [vmem:[#allocation2 + $0x320] sm:$0xff]
    %v224 = vld [vmem:[#allocation2 + $0x328] sm:$0xff]
    %v225 = vld [vmem:[#allocation2 + $0x330] sm:$0xff]
    %v226 = vld [vmem:[#allocation2 + $0x338] sm:$0xff]
    %v227 = vld [vmem:[#allocation2 + $0x340] sm:$0xff]
    %v228 = vld [vmem:[#allocation2 + $0x348] sm:$0xff]
    %v229 = vld [vmem:[#allocation2 + $0x350] sm:$0xff]
    %v230 = vld [vmem:[#allocation2 + $0x358] sm:$0xff]
    %v231 = vld [vmem:[#allocation2 + $0x360] sm:$0xff]
    %v232 = vld [vmem:[#allocation2 + $0x368] sm:$0xff]
    %v233 = vld [vmem:[#allocation2 + $0x370] sm:$0xff]
    %v234 = vld [vmem:[#allocation2 + $0x378] sm:$0xff]
    %v235 = vld [vmem:[%s3] sm:$0x3]
    %v237 = vlaneseq
    %v238 = vshrl.u32 %v237, 7
    %v239 = vsub.s32 0, %v238
    %v240 = vrot.slane %v235, %v239
    %v241 = vlaneseq
    %v242 = vshrl.u32 %v241, 7
    %v243 = vsub.s32 1, %v242
    %v244 = vrot.slane %v235, %v243
    %v251 = vunpack.c.l.b16 %v119
    %v252 = vunpack.c.h.b16 %v119
    %v253 = vunpack.c.l.b16 %v120
    %v254 = vunpack.c.h.b16 %v120
    %v255 = vunpack.c.l.b16 %v121
    %v256 = vunpack.c.h.b16 %v121
    %v257 = vunpack.c.l.b16 %v122
    %v258 = vpack.c.b16 %v251, %v251
    %v259 = vpack.c.b16 %v252, %v252
    %v260 = vpack.c.b16 %v253, %v253
    %v261 = vpack.c.b16 %v254, %v254
    %v262 = vpack.c.b16 %v255, %v255
    %v263 = vpack.c.b16 %v256, %v256
    %v264 = vpack.c.b16 %v257, %v257
    %v384 = vunpack.c.l.b16 %v123
    %v385 = vunpack.c.h.b16 %v123
    %v386 = vunpack.c.l.b16 %v124
    %v387 = vunpack.c.h.b16 %v124
    %v388 = vunpack.c.l.b16 %v125
    %v389 = vunpack.c.h.b16 %v125
    %v390 = vunpack.c.l.b16 %v126
    %v391 = vunpack.c.h.b16 %v126
    %v392 = vunpack.c.l.b16 %v127
    %v393 = vunpack.c.h.b16 %v127
    %v394 = vunpack.c.l.b16 %v128
    %v395 = vunpack.c.h.b16 %v128
    %v396 = vunpack.c.l.b16 %v129
    %v397 = vunpack.c.h.b16 %v129
    %v398 = vunpack.c.l.b16 %v130
    %v399 = vunpack.c.h.b16 %v130
    %v400 = vunpack.c.l.b16 %v131
    %v401 = vunpack.c.h.b16 %v131
    %v402 = vunpack.c.l.b16 %v132
    %v403 = vunpack.c.h.b16 %v132
    %v404 = vunpack.c.l.b16 %v133
    %v405 = vunpack.c.h.b16 %v133
    %v406 = vunpack.c.l.b16 %v134
    %v407 = vunpack.c.h.b16 %v134
    %v408 = vunpack.c.l.b16 %v135
    %v409 = vunpack.c.h.b16 %v135
    %v410 = vunpack.c.l.b16 %v136
    %v411 = vunpack.c.h.b16 %v136
    %v412 = vunpack.c.l.b16 %v137
    %v413 = vunpack.c.h.b16 %v137
    %v414 = vunpack.c.l.b16 %v138
    %v415 = vunpack.c.h.b16 %v138
    %v416 = vunpack.c.l.b16 %v139
    %v417 = vunpack.c.h.b16 %v139
    %v418 = vunpack.c.l.b16 %v140
    %v419 = vunpack.c.h.b16 %v140
    %v420 = vunpack.c.l.b16 %v141
    %v421 = vunpack.c.h.b16 %v141
    %v422 = vunpack.c.l.b16 %v142
    %v423 = vunpack.c.h.b16 %v142
    %v424 = vunpack.c.l.b16 %v143
    %v425 = vunpack.c.h.b16 %v143
    %v426 = vunpack.c.l.b16 %v144
    %v427 = vunpack.c.h.b16 %v144
    %v428 = vunpack.c.l.b16 %v145
    %v429 = vunpack.c.h.b16 %v145
    %v430 = vunpack.c.l.b16 %v146
    %v431 = vunpack.c.h.b16 %v146
    %v432 = vunpack.c.l.b16 %v147
    %v433 = vunpack.c.h.b16 %v147
    %v434 = vunpack.c.l.b16 %v148
    %v435 = vunpack.c.h.b16 %v148
    %v436 = vunpack.c.l.b16 %v149
    %v437 = vunpack.c.h.b16 %v149
    %v438 = vunpack.c.l.b16 %v150
    %v439 = vunpack.c.h.b16 %v150
    %v440 = vunpack.c.l.b16 %v151
    %v441 = vunpack.c.h.b16 %v151
    %v442 = vunpack.c.l.b16 %v152
    %v443 = vunpack.c.h.b16 %v152
    %v444 = vunpack.c.l.b16 %v153
    %v445 = vunpack.c.h.b16 %v153
    %v446 = vunpack.c.l.b16 %v154
    %v447 = vunpack.c.h.b16 %v154
    %v448 = vunpack.c.l.b16 %v155
    %v449 = vunpack.c.h.b16 %v155
    %v450 = vunpack.c.l.b16 %v156
    %v451 = vunpack.c.h.b16 %v156
    %v452 = vunpack.c.l.b16 %v157
    %v453 = vunpack.c.h.b16 %v157
    %v454 = vunpack.c.l.b16 %v158
    %v455 = vunpack.c.h.b16 %v158
    %v456 = vunpack.c.l.b16 %v159
    %v457 = vunpack.c.h.b16 %v159
    %v458 = vunpack.c.l.b16 %v160
    %v459 = vunpack.c.h.b16 %v160
    %v460 = vunpack.c.l.b16 %v161
    %v461 = vunpack.c.h.b16 %v161
    %v462 = vunpack.c.l.b16 %v162
    %v463 = vunpack.c.h.b16 %v162
    %v464 = vunpack.c.l.b16 %v163
    %v465 = vunpack.c.h.b16 %v163
    %v466 = vunpack.c.l.b16 %v164
    %v467 = vunpack.c.h.b16 %v164
    %v468 = vunpack.c.l.b16 %v165
    %v469 = vunpack.c.h.b16 %v165
    %v470 = vunpack.c.l.b16 %v166
    %v471 = vunpack.c.h.b16 %v166
    %v472 = vunpack.c.l.b16 %v167
    %v473 = vunpack.c.h.b16 %v167
    %v474 = vunpack.c.l.b16 %v168
    %v475 = vunpack.c.h.b16 %v168
    %v476 = vunpack.c.l.b16 %v169
    %v477 = vunpack.c.h.b16 %v169
    %v478 = vunpack.c.l.b16 %v170
    %v479 = vunpack.c.h.b16 %v170
    %v480 = vunpack.c.l.b16 %v171
    %v481 = vunpack.c.h.b16 %v171
    %v482 = vunpack.c.l.b16 %v172
    %v483 = vunpack.c.h.b16 %v172
    %v484 = vunpack.c.l.b16 %v173
    %v485 = vunpack.c.h.b16 %v173
    %v486 = vunpack.c.l.b16 %v174
    %v487 = vunpack.c.h.b16 %v174
    %v488 = vunpack.c.l.b16 %v175
    %v489 = vunpack.c.h.b16 %v175
    %v490 = vunpack.c.l.b16 %v176
    %v491 = vunpack.c.h.b16 %v176
    %v492 = vunpack.c.l.b16 %v177
    %v493 = vunpack.c.h.b16 %v177
    %v494 = vunpack.c.l.b16 %v178
    %v495 = vunpack.c.h.b16 %v178
    %v496 = vunpack.c.l.b16 %v179
    %v497 = vunpack.c.h.b16 %v179
    %v498 = vunpack.c.l.b16 %v180
    %v499 = vunpack.c.h.b16 %v180
    %v500 = vunpack.c.l.b16 %v181
    %v501 = vunpack.c.h.b16 %v181
    %v502 = vunpack.c.l.b16 %v182
    %v503 = vunpack.c.h.b16 %v182
    %v504 = vunpack.c.l.b16 %v183
    %v505 = vunpack.c.h.b16 %v183
    %v506 = vunpack.c.l.b16 %v184
    %v507 = vunpack.c.h.b16 %v184
    %v508 = vunpack.c.l.b16 %v185
    %v509 = vunpack.c.h.b16 %v185
    %v510 = vunpack.c.l.b16 %v186
    %v511 = vunpack.c.h.b16 %v186
    %v512 = vunpack.c.l.b16 %v187
    %v513 = vunpack.c.h.b16 %v187
    %v514 = vunpack.c.l.b16 %v188
    %v515 = vunpack.c.h.b16 %v188
    %v516 = vunpack.c.l.b16 %v189
    %v517 = vunpack.c.h.b16 %v189
    %v518 = vunpack.c.l.b16 %v190
    %v519 = vunpack.c.h.b16 %v190
    %v520 = vunpack.c.l.b16 %v191
    %v521 = vunpack.c.h.b16 %v191
    %v522 = vunpack.c.l.b16 %v192
    %v523 = vunpack.c.h.b16 %v192
    %v524 = vunpack.c.l.b16 %v193
    %v525 = vunpack.c.h.b16 %v193
    %v526 = vunpack.c.l.b16 %v194
    %v527 = vunpack.c.h.b16 %v194
    %v528 = vunpack.c.l.b16 %v195
    %v529 = vunpack.c.h.b16 %v195
    %v530 = vunpack.c.l.b16 %v196
    %v531 = vunpack.c.h.b16 %v196
    %v532 = vunpack.c.l.b16 %v197
    %v533 = vunpack.c.h.b16 %v197
    %v534 = vunpack.c.l.b16 %v198
    %v535 = vunpack.c.h.b16 %v198
    %v536 = vunpack.c.l.b16 %v199
    %v537 = vunpack.c.h.b16 %v199
    %v538 = vunpack.c.l.b16 %v200
    %v539 = vunpack.c.h.b16 %v200
    %v540 = vunpack.c.l.b16 %v201
    %v541 = vunpack.c.h.b16 %v201
    %v542 = vunpack.c.l.b16 %v202
    %v543 = vunpack.c.h.b16 %v202
    %v544 = vunpack.c.l.b16 %v203
    %v545 = vunpack.c.h.b16 %v203
    %v546 = vunpack.c.l.b16 %v204
    %v547 = vunpack.c.h.b16 %v204
    %v548 = vunpack.c.l.b16 %v205
    %v549 = vunpack.c.h.b16 %v205
    %v550 = vunpack.c.l.b16 %v206
    %v551 = vunpack.c.h.b16 %v206
    %v552 = vunpack.c.l.b16 %v207
    %v553 = vunpack.c.h.b16 %v207
    %v554 = vunpack.c.l.b16 %v208
    %v555 = vunpack.c.h.b16 %v208
    %v556 = vunpack.c.l.b16 %v209
    %v557 = vunpack.c.h.b16 %v209
    %v558 = vunpack.c.l.b16 %v210
    %v559 = vunpack.c.h.b16 %v210
    %v560 = vunpack.c.l.b16 %v211
    %v561 = vunpack.c.h.b16 %v211
    %v562 = vunpack.c.l.b16 %v212
    %v563 = vunpack.c.h.b16 %v212
    %v564 = vunpack.c.l.b16 %v213
    %v565 = vunpack.c.h.b16 %v213
    %v566 = vunpack.c.l.b16 %v214
    %v567 = vunpack.c.h.b16 %v214
    %v568 = vunpack.c.l.b16 %v215
    %v569 = vunpack.c.h.b16 %v215
    %v570 = vunpack.c.l.b16 %v216
    %v571 = vunpack.c.h.b16 %v216
    %v572 = vunpack.c.l.b16 %v217
    %v573 = vunpack.c.h.b16 %v217
    %v574 = vunpack.c.l.b16 %v218
    %v575 = vunpack.c.h.b16 %v218
    %v576 = vunpack.c.l.b16 %v219
    %v577 = vunpack.c.h.b16 %v219
    %v578 = vunpack.c.l.b16 %v220
    %v579 = vunpack.c.h.b16 %v220
    %v580 = vunpack.c.l.b16 %v221
    %v581 = vunpack.c.h.b16 %v221
    %v582 = vunpack.c.l.b16 %v222
    %v583 = vunpack.c.h.b16 %v222
    %v584 = vunpack.c.l.b16 %v223
    %v585 = vunpack.c.h.b16 %v223
    %v586 = vunpack.c.l.b16 %v224
    %v587 = vunpack.c.h.b16 %v224
    %v588 = vunpack.c.l.b16 %v225
    %v589 = vunpack.c.h.b16 %v225
    %v590 = vunpack.c.l.b16 %v226
    %v591 = vunpack.c.h.b16 %v226
    %v592 = vunpack.c.l.b16 %v227
    %v593 = vunpack.c.h.b16 %v227
    %v594 = vunpack.c.l.b16 %v228
    %v595 = vunpack.c.h.b16 %v228
    %v596 = vunpack.c.l.b16 %v229
    %v597 = vunpack.c.h.b16 %v229
    %v598 = vunpack.c.l.b16 %v230
    %v599 = vunpack.c.h.b16 %v230
    %v600 = vunpack.c.l.b16 %v231
    %v601 = vunpack.c.h.b16 %v231
    %v602 = vunpack.c.l.b16 %v232
    %v603 = vunpack.c.h.b16 %v232
    %v604 = vunpack.c.l.b16 %v233
    %v605 = vunpack.c.h.b16 %v233
    %v606 = vunpack.c.l.b16 %v234
    %v607 = vunpack.c.h.b16 %v234
    %v608 = vpack.c.b16 %v386, %v384
    %v609 = vpack.c.b16 %v387, %v385
    %v610 = vpack.c.b16 %v390, %v388
    %v611 = vpack.c.b16 %v391, %v389
    %v612 = vpack.c.b16 %v394, %v392
    %v613 = vpack.c.b16 %v395, %v393
    %v614 = vpack.c.b16 %v398, %v396
    %v615 = vpack.c.b16 %v399, %v397
    %v616 = vpack.c.b16 %v402, %v400
    %v617 = vpack.c.b16 %v403, %v401
    %v618 = vpack.c.b16 %v406, %v404
    %v619 = vpack.c.b16 %v407, %v405
    %v620 = vpack.c.b16 %v410, %v408
    %v621 = vpack.c.b16 %v411, %v409
    %v622 = vpack.c.b16 %v414, %v412
    %v623 = vpack.c.b16 %v415, %v413
    %v624 = vpack.c.b16 %v418, %v416
    %v625 = vpack.c.b16 %v419, %v417
    %v626 = vpack.c.b16 %v422, %v420
    %v627 = vpack.c.b16 %v423, %v421
    %v628 = vpack.c.b16 %v426, %v424
    %v629 = vpack.c.b16 %v427, %v425
    %v630 = vpack.c.b16 %v430, %v428
    %v631 = vpack.c.b16 %v431, %v429
    %v632 = vpack.c.b16 %v434, %v432
    %v633 = vpack.c.b16 %v435, %v433
    %v634 = vpack.c.b16 %v438, %v436
    %v635 = vpack.c.b16 %v439, %v437
    %v636 = vpack.c.b16 %v442, %v440
    %v637 = vpack.c.b16 %v443, %v441
    %v638 = vpack.c.b16 %v446, %v444
    %v639 = vpack.c.b16 %v447, %v445
    %v640 = vpack.c.b16 %v450, %v448
    %v641 = vpack.c.b16 %v451, %v449
    %v642 = vpack.c.b16 %v454, %v452
    %v643 = vpack.c.b16 %v455, %v453
    %v644 = vpack.c.b16 %v458, %v456
    %v645 = vpack.c.b16 %v459, %v457
    %v646 = vpack.c.b16 %v462, %v460
    %v647 = vpack.c.b16 %v463, %v461
    %v648 = vpack.c.b16 %v466, %v464
    %v649 = vpack.c.b16 %v467, %v465
    %v650 = vpack.c.b16 %v470, %v468
    %v651 = vpack.c.b16 %v471, %v469
    %v652 = vpack.c.b16 %v474, %v472
    %v653 = vpack.c.b16 %v475, %v473
    %v654 = vpack.c.b16 %v478, %v476
    %v655 = vpack.c.b16 %v479, %v477
    %v656 = vpack.c.b16 %v482, %v480
    %v657 = vpack.c.b16 %v483, %v481
    %v658 = vpack.c.b16 %v486, %v484
    %v659 = vpack.c.b16 %v487, %v485
    %v660 = vpack.c.b16 %v490, %v488
    %v661 = vpack.c.b16 %v491, %v489
    %v662 = vpack.c.b16 %v494, %v492
    %v663 = vpack.c.b16 %v495, %v493
    %v664 = vpack.c.b16 %v498, %v496
    %v665 = vpack.c.b16 %v499, %v497
    %v666 = vpack.c.b16 %v502, %v500
    %v667 = vpack.c.b16 %v503, %v501
    %v668 = vpack.c.b16 %v506, %v504
    %v669 = vpack.c.b16 %v507, %v505
    %v670 = vpack.c.b16 %v510, %v508
    %v671 = vpack.c.b16 %v511, %v509
    %v672 = vpack.c.b16 %v514, %v512
    %v673 = vpack.c.b16 %v515, %v513
    %v674 = vpack.c.b16 %v518, %v516
    %v675 = vpack.c.b16 %v519, %v517
    %v676 = vpack.c.b16 %v522, %v520
    %v677 = vpack.c.b16 %v523, %v521
    %v678 = vpack.c.b16 %v526, %v524
    %v679 = vpack.c.b16 %v527, %v525
    %v680 = vpack.c.b16 %v530, %v528
    %v681 = vpack.c.b16 %v531, %v529
    %v682 = vpack.c.b16 %v534, %v532
    %v683 = vpack.c.b16 %v535, %v533
    %v684 = vpack.c.b16 %v538, %v536
    %v685 = vpack.c.b16 %v539, %v537
    %v686 = vpack.c.b16 %v542, %v540
    %v687 = vpack.c.b16 %v543, %v541
    %v688 = vpack.c.b16 %v546, %v544
    %v689 = vpack.c.b16 %v547, %v545
    %v690 = vpack.c.b16 %v550, %v548
    %v691 = vpack.c.b16 %v551, %v549
    %v692 = vpack.c.b16 %v554, %v552
    %v693 = vpack.c.b16 %v555, %v553
    %v694 = vpack.c.b16 %v558, %v556
    %v695 = vpack.c.b16 %v559, %v557
    %v696 = vpack.c.b16 %v562, %v560
    %v697 = vpack.c.b16 %v563, %v561
    %v698 = vpack.c.b16 %v566, %v564
    %v699 = vpack.c.b16 %v567, %v565
    %v700 = vpack.c.b16 %v570, %v568
    %v701 = vpack.c.b16 %v571, %v569
    %v702 = vpack.c.b16 %v574, %v572
    %v703 = vpack.c.b16 %v575, %v573
    %v704 = vpack.c.b16 %v578, %v576
    %v705 = vpack.c.b16 %v579, %v577
    %v706 = vpack.c.b16 %v582, %v580
    %v707 = vpack.c.b16 %v583, %v581
    %v708 = vpack.c.b16 %v586, %v584
    %v709 = vpack.c.b16 %v587, %v585
    %v710 = vpack.c.b16 %v590, %v588
    %v711 = vpack.c.b16 %v591, %v589
    %v712 = vpack.c.b16 %v594, %v592
    %v713 = vpack.c.b16 %v595, %v593
    %v714 = vpack.c.b16 %v598, %v596
    %v715 = vpack.c.b16 %v599, %v597
    %v716 = vpack.c.b16 %v602, %v600
    %v717 = vpack.c.b16 %v603, %v601
    %v718 = vpack.c.b16 %v606, %v604
    %v719 = vpack.c.b16 %v607, %v605
    %832 = vmatprep.subr.bf16.mxu0 %v609
    %833 = vmatpush1.bf16.msra.mxu0 %v608
    %834 = vmatprep.subr.bf16.mxu0 %v611
    %835 = vmatpush1.bf16.msra.mxu0 %v610
    %836 = vmatprep.subr.bf16.mxu0 %v613
    %837 = vmatpush1.bf16.msra.mxu0 %v612
    %838 = vmatprep.subr.bf16.mxu0 %v615
    %839 = vmatpush1.bf16.msra.mxu0 %v614
    %840 = vmatprep.subr.bf16.mxu0 %v617
    %841 = vmatpush1.bf16.msra.mxu0 %v616
    %842 = vmatprep.subr.bf16.mxu0 %v619
    %843 = vmatpush1.bf16.msra.mxu0 %v618
    %844 = vmatprep.subr.bf16.mxu0 %v621
    %845 = vmatpush1.bf16.msra.mxu0 %v620
    %846 = vmatprep.subr.bf16.mxu0 %v623
    %847 = vmatpush1.bf16.msra.mxu0 %v622
    %848 = vmatprep.subr.bf16.mxu0 %v625
    %849 = vmatpush1.bf16.msra.mxu0 %v624
    %850 = vmatprep.subr.bf16.mxu0 %v627
    %851 = vmatpush1.bf16.msra.mxu0 %v626
    %852 = vmatprep.subr.bf16.mxu0 %v629
    %853 = vmatpush1.bf16.msra.mxu0 %v628
    %854 = vmatprep.subr.bf16.mxu0 %v631
    %855 = vmatpush1.bf16.msra.mxu0 %v630
    %856 = vmatprep.subr.bf16.mxu0 %v633
    %857 = vmatpush1.bf16.msra.mxu0 %v632
    %858 = vmatprep.subr.bf16.mxu0 %v635
    %859 = vmatpush1.bf16.msra.mxu0 %v634
    %860 = vmatprep.subr.bf16.mxu0 %v637
    %861 = vmatpush1.bf16.msra.mxu0 %v636
    %862 = vmatprep.subr.bf16.mxu0 %v639
    %863 = vmatpush1.bf16.msra.mxu0 %v638
    %864 = vmatprep.mubr.bf16.mxu0 %v259
    %865 = vmatmul.mubr.bf16.gmra.mrb[0].mxu0 %v258
    %v866 = vpop.f32.mrb[0].mxu0
    %v867 = vadd.f32 %v240, %v866
    %v868 = vpop.f32.mrb[0].mxu0
    %v869 = vadd.f32 %v244, %v868
    %v870 = vpop.f32.mrb[0].mxu0
    %v871 = vpop.f32.mrb[0].mxu0
    %872 = vdwg.mxu0
    %873 = vmatprep.subr.bf16.mxu0 %v641
    %874 = vmatpush1.bf16.msra.mxu0 %v640
    %875 = vmatprep.subr.bf16.mxu0 %v643
    %876 = vmatpush1.bf16.msra.mxu0 %v642
    %877 = vmatprep.subr.bf16.mxu0 %v645
    %878 = vmatpush1.bf16.msra.mxu0 %v644
    %879 = vmatprep.subr.bf16.mxu0 %v647
    %880 = vmatpush1.bf16.msra.mxu0 %v646
    %881 = vmatprep.subr.bf16.mxu0 %v649
    %882 = vmatpush1.bf16.msra.mxu0 %v648
    %883 = vmatprep.subr.bf16.mxu0 %v651
    %884 = vmatpush1.bf16.msra.mxu0 %v650
    %885 = vmatprep.subr.bf16.mxu0 %v653
    %886 = vmatpush1.bf16.msra.mxu0 %v652
    %887 = vmatprep.subr.bf16.mxu0 %v655
    %888 = vmatpush1.bf16.msra.mxu0 %v654
    %889 = vmatprep.subr.bf16.mxu0 %v657
    %890 = vmatpush1.bf16.msra.mxu0 %v656
    %891 = vmatprep.subr.bf16.mxu0 %v659
    %892 = vmatpush1.bf16.msra.mxu0 %v658
    %893 = vmatprep.subr.bf16.mxu0 %v661
    %894 = vmatpush1.bf16.msra.mxu0 %v660
    %895 = vmatprep.subr.bf16.mxu0 %v663
    %896 = vmatpush1.bf16.msra.mxu0 %v662
    %897 = vmatprep.subr.bf16.mxu0 %v665
    %898 = vmatpush1.bf16.msra.mxu0 %v664
    %899 = vmatprep.subr.bf16.mxu0 %v667
    %900 = vmatpush1.bf16.msra.mxu0 %v666
    %901 = vmatprep.subr.bf16.mxu0 %v669
    %902 = vmatpush1.bf16.msra.mxu0 %v668
    %903 = vmatprep.subr.bf16.mxu0 %v671
    %904 = vmatpush1.bf16.msra.mxu0 %v670
    %905 = vmatprep.mubr.bf16.mxu0 %v261
    %906 = vmatmul.mubr.bf16.gmra.mrb[0].mxu0 %v260
    %v907 = vpop.f32.mrb[0].mxu0
    %v908 = vadd.f32 %v867, %v907
    %v909 = vpop.f32.mrb[0].mxu0
    %v910 = vadd.f32 %v869, %v909
    %v911 = vpop.f32.mrb[0].mxu0
    %v912 = vpop.f32.mrb[0].mxu0
    %913 = vdwg.mxu0
    %914 = vmatprep.subr.bf16.mxu0 %v673
    %915 = vmatpush1.bf16.msra.mxu0 %v672
    %916 = vmatprep.subr.bf16.mxu0 %v675
    %917 = vmatpush1.bf16.msra.mxu0 %v674
    %918 = vmatprep.subr.bf16.mxu0 %v677
    %919 = vmatpush1.bf16.msra.mxu0 %v676
    %920 = vmatprep.subr.bf16.mxu0 %v679
    %921 = vmatpush1.bf16.msra.mxu0 %v678
    %922 = vmatprep.subr.bf16.mxu0 %v681
    %923 = vmatpush1.bf16.msra.mxu0 %v680
    %924 = vmatprep.subr.bf16.mxu0 %v683
    %925 = vmatpush1.bf16.msra.mxu0 %v682
    %926 = vmatprep.subr.bf16.mxu0 %v685
    %927 = vmatpush1.bf16.msra.mxu0 %v684
    %928 = vmatprep.subr.bf16.mxu0 %v687
    %929 = vmatpush1.bf16.msra.mxu0 %v686
    %930 = vmatprep.subr.bf16.mxu0 %v689
    %931 = vmatpush1.bf16.msra.mxu0 %v688
    %932 = vmatprep.subr.bf16.mxu0 %v691
    %933 = vmatpush1.bf16.msra.mxu0 %v690
    %934 = vmatprep.subr.bf16.mxu0 %v693
    %935 = vmatpush1.bf16.msra.mxu0 %v692
    %936 = vmatprep.subr.bf16.mxu0 %v695
    %937 = vmatpush1.bf16.msra.mxu0 %v694
    %938 = vmatprep.subr.bf16.mxu0 %v697
    %939 = vmatpush1.bf16.msra.mxu0 %v696
    %940 = vmatprep.subr.bf16.mxu0 %v699
    %941 = vmatpush1.bf16.msra.mxu0 %v698
    %942 = vmatprep.subr.bf16.mxu0 %v701
    %943 = vmatpush1.bf16.msra.mxu0 %v700
    %944 = vmatprep.subr.bf16.mxu0 %v703
    %945 = vmatpush1.bf16.msra.mxu0 %v702
    %946 = vmatprep.mubr.bf16.mxu0 %v263
    %947 = vmatmul.mubr.bf16.gmra.mrb[0].mxu0 %v262
    %v948 = vpop.f32.mrb[0].mxu0
    %v949 = vadd.f32 %v908, %v948
    %v950 = vpop.f32.mrb[0].mxu0
    %v951 = vadd.f32 %v910, %v950
    %v952 = vpop.f32.mrb[0].mxu0
    %v953 = vpop.f32.mrb[0].mxu0
    %954 = vdwg.mxu0
    %955 = vmatprep.subr.bf16.mxu0 %v705
    %956 = vmatpush1.bf16.msra.mxu0 %v704
    %957 = vmatprep.subr.bf16.mxu0 %v707
    %958 = vmatpush1.bf16.msra.mxu0 %v706
    %959 = vmatprep.subr.bf16.mxu0 %v709
    %960 = vmatpush1.bf16.msra.mxu0 %v708
    %961 = vmatprep.subr.bf16.mxu0 %v711
    %962 = vmatpush1.bf16.msra.mxu0 %v710
    %963 = vmatprep.subr.bf16.mxu0 %v713
    %964 = vmatpush1.bf16.msra.mxu0 %v712
    %965 = vmatprep.subr.bf16.mxu0 %v715
    %966 = vmatpush1.bf16.msra.mxu0 %v714
    %967 = vmatprep.subr.bf16.mxu0 %v717
    %968 = vmatpush1.bf16.msra.mxu0 %v716
    %969 = vmatprep.subr.bf16.mxu0 %v719
    %970 = vmatpush1.bf16.msra.mxu0 %v718
    %971 = vmatprep.subr.bf16.mxu0 0
    %972 = vmatpush1.bf16.msra.mxu0 0
    %973 = vmatprep.subr.bf16.mxu0 0
    %974 = vmatpush1.bf16.msra.mxu0 0
    %975 = vmatprep.subr.bf16.mxu0 0
    %976 = vmatpush1.bf16.msra.mxu0 0
    %977 = vmatprep.subr.bf16.mxu0 0
    %978 = vmatpush1.bf16.msra.mxu0 0
    %979 = vmatprep.subr.bf16.mxu0 0
    %980 = vmatpush1.bf16.msra.mxu0 0
    %981 = vmatprep.subr.bf16.mxu0 0
    %982 = vmatpush1.bf16.msra.mxu0 0
    %983 = vmatprep.subr.bf16.mxu0 0
    %984 = vmatpush1.bf16.msra.mxu0 0
    %985 = vmatprep.subr.bf16.mxu0 0
    %986 = vmatpush1.bf16.msra.mxu0 0
    %987 = vmatprep.mubr.bf16.mxu0 0
    %988 = vmatmul.mubr.bf16.gmra.mrb[0].mxu0 %v264
    %v989 = vpop.f32.mrb[0].mxu0
    %v990 = vadd.f32 %v949, %v989
    %v991 = vpop.f32.mrb[0].mxu0
    %v992 = vadd.f32 %v951, %v991
    %v993 = vpop.f32.mrb[0].mxu0
    %v994 = vpop.f32.mrb[0].mxu0
    %995 = vdwg.mxu0
    %v996 = vmax.f32 %v990, 0.0
    %v997 = vmax.f32 %v992, 0.0
    %v998 = vpack.c.bf16 %v996, %v996
    %v999 = vpack.c.bf16 %v997, %v997
    %v1000 = vld [vmem:[#allocation4] sm:$0xff]
    %v1001 = vld [vmem:[#allocation4 + $0x8] sm:$0xff]
    %v1002 = vld [vmem:[#allocation4 + $0x10] sm:$0xff]
    %v1003 = vld [vmem:[#allocation4 + $0x18] sm:$0xff]
    %v1004 = vld [vmem:[#allocation4 + $0x20] sm:$0xff]
    %v1005 = vld [vmem:[#allocation4 + $0x28] sm:$0xff]
    %v1006 = vld [vmem:[#allocation4 + $0x30] sm:$0xff]
    %v1007 = vld [vmem:[#allocation4 + $0x38] sm:$0xff]
    %v1008 = vld [vmem:[#allocation4 + $0x40] sm:$0xff]
    %v1009 = vld [vmem:[#allocation4 + $0x48] sm:$0xff]
    %v1010 = vld [vmem:[#allocation4 + $0x50] sm:$0xff]
    %v1011 = vld [vmem:[#allocation4 + $0x58] sm:$0xff]
    %v1012 = vld [vmem:[#allocation4 + $0x60] sm:$0xff]
    %v1013 = vld [vmem:[#allocation4 + $0x68] sm:$0xff]
    %v1014 = vld [vmem:[#allocation4 + $0x70] sm:$0xff]
    %v1015 = vld [vmem:[#allocation4 + $0x78] sm:$0xff]
    %v1016 = vld [vmem:[#allocation4 + $0x80] sm:$0xff]
    %v1017 = vld [vmem:[#allocation4 + $0x88] sm:$0xff]
    %v1018 = vld [vmem:[#allocation4 + $0x90] sm:$0xff]
    %v1019 = vld [vmem:[#allocation4 + $0x98] sm:$0xff]
    %v1020 = vld [vmem:[#allocation4 + $0xa0] sm:$0xff]
    %v1021 = vld [vmem:[#allocation4 + $0xa8] sm:$0xff]
    %v1022 = vld [vmem:[#allocation4 + $0xb0] sm:$0xff]
    %v1023 = vld [vmem:[#allocation4 + $0xb8] sm:$0xff]
    %v1024 = vld [vmem:[#allocation4 + $0xc0] sm:$0xff]
    %v1025 = vld [vmem:[#allocation4 + $0xc8] sm:$0xff]
    %v1026 = vld [vmem:[#allocation4 + $0xd0] sm:$0xff]
    %v1027 = vld [vmem:[#allocation4 + $0xd8] sm:$0xff]
    %v1028 = vld [vmem:[#allocation4 + $0xe0] sm:$0xff]
    %v1029 = vld [vmem:[#allocation4 + $0xe8] sm:$0xff]
    %v1030 = vld [vmem:[#allocation4 + $0xf0] sm:$0xff]
    %v1031 = vld [vmem:[#allocation4 + $0xf8] sm:$0xff]
    %v1032 = vld [vmem:[%s5] sm:$0x3]
    %v1034 = vlaneseq
    %v1035 = vshrl.u32 %v1034, 7
    %v1036 = vsub.s32 0, %v1035
    %v1037 = vrot.slane %v1032, %v1036
    %v1038 = vlaneseq
    %v1039 = vshrl.u32 %v1038, 7
    %v1040 = vsub.s32 1, %v1039
    %v1041 = vrot.slane %v1032, %v1040
    %v1076 = vunpack.c.l.b16 %v1000
    %v1077 = vunpack.c.h.b16 %v1000
    %v1078 = vunpack.c.l.b16 %v1001
    %v1079 = vunpack.c.h.b16 %v1001
    %v1080 = vunpack.c.l.b16 %v1002
    %v1081 = vunpack.c.h.b16 %v1002
    %v1082 = vunpack.c.l.b16 %v1003
    %v1083 = vunpack.c.h.b16 %v1003
    %v1084 = vunpack.c.l.b16 %v1004
    %v1085 = vunpack.c.h.b16 %v1004
    %v1086 = vunpack.c.l.b16 %v1005
    %v1087 = vunpack.c.h.b16 %v1005
    %v1088 = vunpack.c.l.b16 %v1006
    %v1089 = vunpack.c.h.b16 %v1006
    %v1090 = vunpack.c.l.b16 %v1007
    %v1091 = vunpack.c.h.b16 %v1007
    %v1092 = vunpack.c.l.b16 %v1008
    %v1093 = vunpack.c.h.b16 %v1008
    %v1094 = vunpack.c.l.b16 %v1009
    %v1095 = vunpack.c.h.b16 %v1009
    %v1096 = vunpack.c.l.b16 %v1010
    %v1097 = vunpack.c.h.b16 %v1010
    %v1098 = vunpack.c.l.b16 %v1011
    %v1099 = vunpack.c.h.b16 %v1011
    %v1100 = vunpack.c.l.b16 %v1012
    %v1101 = vunpack.c.h.b16 %v1012
    %v1102 = vunpack.c.l.b16 %v1013
    %v1103 = vunpack.c.h.b16 %v1013
    %v1104 = vunpack.c.l.b16 %v1014
    %v1105 = vunpack.c.h.b16 %v1014
    %v1106 = vunpack.c.l.b16 %v1015
    %v1107 = vunpack.c.h.b16 %v1015
    %v1108 = vunpack.c.l.b16 %v1016
    %v1109 = vunpack.c.h.b16 %v1016
    %v1110 = vunpack.c.l.b16 %v1017
    %v1111 = vunpack.c.h.b16 %v1017
    %v1112 = vunpack.c.l.b16 %v1018
    %v1113 = vunpack.c.h.b16 %v1018
    %v1114 = vunpack.c.l.b16 %v1019
    %v1115 = vunpack.c.h.b16 %v1019
    %v1116 = vunpack.c.l.b16 %v1020
    %v1117 = vunpack.c.h.b16 %v1020
    %v1118 = vunpack.c.l.b16 %v1021
    %v1119 = vunpack.c.h.b16 %v1021
    %v1120 = vunpack.c.l.b16 %v1022
    %v1121 = vunpack.c.h.b16 %v1022
    %v1122 = vunpack.c.l.b16 %v1023
    %v1123 = vunpack.c.h.b16 %v1023
    %v1124 = vunpack.c.l.b16 %v1024
    %v1125 = vunpack.c.h.b16 %v1024
    %v1126 = vunpack.c.l.b16 %v1025
    %v1127 = vunpack.c.h.b16 %v1025
    %v1128 = vunpack.c.l.b16 %v1026
    %v1129 = vunpack.c.h.b16 %v1026
    %v1130 = vunpack.c.l.b16 %v1027
    %v1131 = vunpack.c.h.b16 %v1027
    %v1132 = vunpack.c.l.b16 %v1028
    %v1133 = vunpack.c.h.b16 %v1028
    %v1134 = vunpack.c.l.b16 %v1029
    %v1135 = vunpack.c.h.b16 %v1029
    %v1136 = vunpack.c.l.b16 %v1030
    %v1137 = vunpack.c.h.b16 %v1030
    %v1138 = vunpack.c.l.b16 %v1031
    %v1139 = vunpack.c.h.b16 %v1031
    %v1140 = vpack.c.b16 %v1078, %v1076
    %v1141 = vpack.c.b16 %v1079, %v1077
    %v1142 = vpack.c.b16 %v1082, %v1080
    %v1143 = vpack.c.b16 %v1083, %v1081
    %v1144 = vpack.c.b16 %v1086, %v1084
    %v1145 = vpack.c.b16 %v1087, %v1085
    %v1146 = vpack.c.b16 %v1090, %v1088
    %v1147 = vpack.c.b16 %v1091, %v1089
    %v1148 = vpack.c.b16 %v1094, %v1092
    %v1149 = vpack.c.b16 %v1095, %v1093
    %v1150 = vpack.c.b16 %v1098, %v1096
    %v1151 = vpack.c.b16 %v1099, %v1097
    %v1152 = vpack.c.b16 %v1102, %v1100
    %v1153 = vpack.c.b16 %v1103, %v1101
    %v1154 = vpack.c.b16 %v1106, %v1104
    %v1155 = vpack.c.b16 %v1107, %v1105
    %v1156 = vpack.c.b16 %v1110, %v1108
    %v1157 = vpack.c.b16 %v1111, %v1109
    %v1158 = vpack.c.b16 %v1114, %v1112
    %v1159 = vpack.c.b16 %v1115, %v1113
    %v1160 = vpack.c.b16 %v1118, %v1116
    %v1161 = vpack.c.b16 %v1119, %v1117
    %v1162 = vpack.c.b16 %v1122, %v1120
    %v1163 = vpack.c.b16 %v1123, %v1121
    %v1164 = vpack.c.b16 %v1126, %v1124
    %v1165 = vpack.c.b16 %v1127, %v1125
    %v1166 = vpack.c.b16 %v1130, %v1128
    %v1167 = vpack.c.b16 %v1131, %v1129
    %v1168 = vpack.c.b16 %v1134, %v1132
    %v1169 = vpack.c.b16 %v1135, %v1133
    %v1170 = vpack.c.b16 %v1138, %v1136
    %v1171 = vpack.c.b16 %v1139, %v1137
    %1204 = vmatprep.subr.bf16.mxu0 %v1141
    %1205 = vmatpush1.bf16.msra.mxu0 %v1140
    %1206 = vmatprep.subr.bf16.mxu0 %v1143
    %1207 = vmatpush1.bf16.msra.mxu0 %v1142
    %1208 = vmatprep.subr.bf16.mxu0 %v1145
    %1209 = vmatpush1.bf16.msra.mxu0 %v1144
    %1210 = vmatprep.subr.bf16.mxu0 %v1147
    %1211 = vmatpush1.bf16.msra.mxu0 %v1146
    %1212 = vmatprep.subr.bf16.mxu0 %v1149
    %1213 = vmatpush1.bf16.msra.mxu0 %v1148
    %1214 = vmatprep.subr.bf16.mxu0 %v1151
    %1215 = vmatpush1.bf16.msra.mxu0 %v1150
    %1216 = vmatprep.subr.bf16.mxu0 %v1153
    %1217 = vmatpush1.bf16.msra.mxu0 %v1152
    %1218 = vmatprep.subr.bf16.mxu0 %v1155
    %1219 = vmatpush1.bf16.msra.mxu0 %v1154
    %1220 = vmatprep.subr.bf16.mxu0 %v1157
    %1221 = vmatpush1.bf16.msra.mxu0 %v1156
    %1222 = vmatprep.subr.bf16.mxu0 %v1159
    %1223 = vmatpush1.bf16.msra.mxu0 %v1158
    %1224 = vmatprep.subr.bf16.mxu0 %v1161
    %1225 = vmatpush1.bf16.msra.mxu0 %v1160
    %1226 = vmatprep.subr.bf16.mxu0 %v1163
    %1227 = vmatpush1.bf16.msra.mxu0 %v1162
    %1228 = vmatprep.subr.bf16.mxu0 %v1165
    %1229 = vmatpush1.bf16.msra.mxu0 %v1164
    %1230 = vmatprep.subr.bf16.mxu0 %v1167
    %1231 = vmatpush1.bf16.msra.mxu0 %v1166
    %1232 = vmatprep.subr.bf16.mxu0 %v1169
    %1233 = vmatpush1.bf16.msra.mxu0 %v1168
    %1234 = vmatprep.subr.bf16.mxu0 %v1171
    %1235 = vmatpush1.bf16.msra.mxu0 %v1170
    %1236 = vmatprep.mubr.bf16.mxu0 %v999
    %1237 = vmatmul.mubr.bf16.gmra.mrb[0].mxu0 %v998
    %v1238 = vpop.f32.mrb[0].mxu0
    %v1239 = vadd.f32 %v1037, %v1238
    %v1240 = vpop.f32.mrb[0].mxu0
    %v1241 = vadd.f32 %v1041, %v1240
    %v1242 = vpop.f32.mrb[0].mxu0
    %v1243 = vpop.f32.mrb[0].mxu0
    %1244 = vdwg.mxu0
    %v1245 = vmax.f32 %v1239, 0.0
    %v1246 = vmax.f32 %v1241, 0.0
    %v1247 = vpack.c.bf16 %v1245, %v1245
    %v1248 = vpack.c.bf16 %v1246, %v1246
    %v1249 = vld [vmem:[#allocation6] sm:$0xff]
    %v1250 = vld [vmem:[#allocation6 + $0x8] sm:$0xff]
    %v1251 = vld [vmem:[#allocation6 + $0x10] sm:$0xff]
    %v1252 = vld [vmem:[#allocation6 + $0x18] sm:$0xff]
    %v1253 = vld [vmem:[#allocation6 + $0x20] sm:$0xff]
    %v1254 = vld [vmem:[#allocation6 + $0x28] sm:$0xff]
    %v1255 = vld [vmem:[#allocation6 + $0x30] sm:$0xff]
    %v1256 = vld [vmem:[#allocation6 + $0x38] sm:$0xff]
    %v1257 = vld [vmem:[#allocation6 + $0x40] sm:$0xff]
    %v1258 = vld [vmem:[#allocation6 + $0x48] sm:$0xff]
    %v1259 = vld [vmem:[#allocation6 + $0x50] sm:$0xff]
    %v1260 = vld [vmem:[#allocation6 + $0x58] sm:$0xff]
    %v1261 = vld [vmem:[#allocation6 + $0x60] sm:$0xff]
    %v1262 = vld [vmem:[#allocation6 + $0x68] sm:$0xff]
    %v1263 = vld [vmem:[#allocation6 + $0x70] sm:$0xff]
    %v1264 = vld [vmem:[#allocation6 + $0x78] sm:$0xff]
    %v1265 = vld [vmem:[#allocation6 + $0x80] sm:$0xff]
    %v1266 = vld [vmem:[#allocation6 + $0x88] sm:$0xff]
    %v1267 = vld [vmem:[#allocation6 + $0x90] sm:$0xff]
    %v1268 = vld [vmem:[#allocation6 + $0x98] sm:$0xff]
    %v1269 = vld [vmem:[#allocation6 + $0xa0] sm:$0xff]
    %v1270 = vld [vmem:[#allocation6 + $0xa8] sm:$0xff]
    %v1271 = vld [vmem:[#allocation6 + $0xb0] sm:$0xff]
    %v1272 = vld [vmem:[#allocation6 + $0xb8] sm:$0xff]
    %v1273 = vld [vmem:[#allocation6 + $0xc0] sm:$0xff]
    %v1274 = vld [vmem:[#allocation6 + $0xc8] sm:$0xff]
    %v1275 = vld [vmem:[#allocation6 + $0xd0] sm:$0xff]
    %v1276 = vld [vmem:[#allocation6 + $0xd8] sm:$0xff]
    %v1277 = vld [vmem:[#allocation6 + $0xe0] sm:$0xff]
    %v1278 = vld [vmem:[#allocation6 + $0xe8] sm:$0xff]
    %v1279 = vld [vmem:[#allocation6 + $0xf0] sm:$0xff]
    %v1280 = vld [vmem:[#allocation6 + $0xf8] sm:$0xff]
    %v1281 = vld [vmem:[%s7] sm:$0x3]
    %v1283 = vlaneseq
    %v1284 = vshrl.u32 %v1283, 7
    %v1285 = vsub.s32 0, %v1284
    %v1286 = vrot.slane %v1281, %v1285
    %v1287 = vlaneseq
    %v1288 = vshrl.u32 %v1287, 7
    %v1289 = vsub.s32 1, %v1288
    %v1290 = vrot.slane %v1281, %v1289
    %v1325 = vunpack.c.l.b16 %v1249
    %v1326 = vunpack.c.h.b16 %v1249
    %v1327 = vunpack.c.l.b16 %v1250
    %v1328 = vunpack.c.h.b16 %v1250
    %v1329 = vunpack.c.l.b16 %v1251
    %v1330 = vunpack.c.h.b16 %v1251
    %v1331 = vunpack.c.l.b16 %v1252
    %v1332 = vunpack.c.h.b16 %v1252
    %v1333 = vunpack.c.l.b16 %v1253
    %v1334 = vunpack.c.h.b16 %v1253
    %v1335 = vunpack.c.l.b16 %v1254
    %v1336 = vunpack.c.h.b16 %v1254
    %v1337 = vunpack.c.l.b16 %v1255
    %v1338 = vunpack.c.h.b16 %v1255
    %v1339 = vunpack.c.l.b16 %v1256
    %v1340 = vunpack.c.h.b16 %v1256
    %v1341 = vunpack.c.l.b16 %v1257
    %v1342 = vunpack.c.h.b16 %v1257
    %v1343 = vunpack.c.l.b16 %v1258
    %v1344 = vunpack.c.h.b16 %v1258
    %v1345 = vunpack.c.l.b16 %v1259
    %v1346 = vunpack.c.h.b16 %v1259
    %v1347 = vunpack.c.l.b16 %v1260
    %v1348 = vunpack.c.h.b16 %v1260
    %v1349 = vunpack.c.l.b16 %v1261
    %v1350 = vunpack.c.h.b16 %v1261
    %v1351 = vunpack.c.l.b16 %v1262
    %v1352 = vunpack.c.h.b16 %v1262
    %v1353 = vunpack.c.l.b16 %v1263
    %v1354 = vunpack.c.h.b16 %v1263
    %v1355 = vunpack.c.l.b16 %v1264
    %v1356 = vunpack.c.h.b16 %v1264
    %v1357 = vunpack.c.l.b16 %v1265
    %v1358 = vunpack.c.h.b16 %v1265
    %v1359 = vunpack.c.l.b16 %v1266
    %v1360 = vunpack.c.h.b16 %v1266
    %v1361 = vunpack.c.l.b16 %v1267
    %v1362 = vunpack.c.h.b16 %v1267
    %v1363 = vunpack.c.l.b16 %v1268
    %v1364 = vunpack.c.h.b16 %v1268
    %v1365 = vunpack.c.l.b16 %v1269
    %v1366 = vunpack.c.h.b16 %v1269
    %v1367 = vunpack.c.l.b16 %v1270
    %v1368 = vunpack.c.h.b16 %v1270
    %v1369 = vunpack.c.l.b16 %v1271
    %v1370 = vunpack.c.h.b16 %v1271
    %v1371 = vunpack.c.l.b16 %v1272
    %v1372 = vunpack.c.h.b16 %v1272
    %v1373 = vunpack.c.l.b16 %v1273
    %v1374 = vunpack.c.h.b16 %v1273
    %v1375 = vunpack.c.l.b16 %v1274
    %v1376 = vunpack.c.h.b16 %v1274
    %v1377 = vunpack.c.l.b16 %v1275
    %v1378 = vunpack.c.h.b16 %v1275
    %v1379 = vunpack.c.l.b16 %v1276
    %v1380 = vunpack.c.h.b16 %v1276
    %v1381 = vunpack.c.l.b16 %v1277
    %v1382 = vunpack.c.h.b16 %v1277
    %v1383 = vunpack.c.l.b16 %v1278
    %v1384 = vunpack.c.h.b16 %v1278
    %v1385 = vunpack.c.l.b16 %v1279
    %v1386 = vunpack.c.h.b16 %v1279
    %v1387 = vunpack.c.l.b16 %v1280
    %v1388 = vunpack.c.h.b16 %v1280
    %v1389 = vpack.c.b16 %v1327, %v1325
    %v1390 = vpack.c.b16 %v1328, %v1326
    %v1391 = vpack.c.b16 %v1331, %v1329
    %v1392 = vpack.c.b16 %v1332, %v1330
    %v1393 = vpack.c.b16 %v1335, %v1333
    %v1394 = vpack.c.b16 %v1336, %v1334
    %v1395 = vpack.c.b16 %v1339, %v1337
    %v1396 = vpack.c.b16 %v1340, %v1338
    %v1397 = vpack.c.b16 %v1343, %v1341
    %v1398 = vpack.c.b16 %v1344, %v1342
    %v1399 = vpack.c.b16 %v1347, %v1345
    %v1400 = vpack.c.b16 %v1348, %v1346
    %v1401 = vpack.c.b16 %v1351, %v1349
    %v1402 = vpack.c.b16 %v1352, %v1350
    %v1403 = vpack.c.b16 %v1355, %v1353
    %v1404 = vpack.c.b16 %v1356, %v1354
    %v1405 = vpack.c.b16 %v1359, %v1357
    %v1406 = vpack.c.b16 %v1360, %v1358
    %v1407 = vpack.c.b16 %v1363, %v1361
    %v1408 = vpack.c.b16 %v1364, %v1362
    %v1409 = vpack.c.b16 %v1367, %v1365
    %v1410 = vpack.c.b16 %v1368, %v1366
    %v1411 = vpack.c.b16 %v1371, %v1369
    %v1412 = vpack.c.b16 %v1372, %v1370
    %v1413 = vpack.c.b16 %v1375, %v1373
    %v1414 = vpack.c.b16 %v1376, %v1374
    %v1415 = vpack.c.b16 %v1379, %v1377
    %v1416 = vpack.c.b16 %v1380, %v1378
    %v1417 = vpack.c.b16 %v1383, %v1381
    %v1418 = vpack.c.b16 %v1384, %v1382
    %v1419 = vpack.c.b16 %v1387, %v1385
    %v1420 = vpack.c.b16 %v1388, %v1386
    %1453 = vmatprep.subr.bf16.mxu0 %v1390
    %1454 = vmatpush1.bf16.msra.mxu0 %v1389
    %1455 = vmatprep.subr.bf16.mxu0 %v1392
    %1456 = vmatpush1.bf16.msra.mxu0 %v1391
    %1457 = vmatprep.subr.bf16.mxu0 %v1394
    %1458 = vmatpush1.bf16.msra.mxu0 %v1393
    %1459 = vmatprep.subr.bf16.mxu0 %v1396
    %1460 = vmatpush1.bf16.msra.mxu0 %v1395
    %1461 = vmatprep.subr.bf16.mxu0 %v1398
    %1462 = vmatpush1.bf16.msra.mxu0 %v1397
    %1463 = vmatprep.subr.bf16.mxu0 %v1400
    %1464 = vmatpush1.bf16.msra.mxu0 %v1399
    %1465 = vmatprep.subr.bf16.mxu0 %v1402
    %1466 = vmatpush1.bf16.msra.mxu0 %v1401
    %1467 = vmatprep.subr.bf16.mxu0 %v1404
    %1468 = vmatpush1.bf16.msra.mxu0 %v1403
    %1469 = vmatprep.subr.bf16.mxu0 %v1406
    %1470 = vmatpush1.bf16.msra.mxu0 %v1405
    %1471 = vmatprep.subr.bf16.mxu0 %v1408
    %1472 = vmatpush1.bf16.msra.mxu0 %v1407
    %1473 = vmatprep.subr.bf16.mxu0 %v1410
    %1474 = vmatpush1.bf16.msra.mxu0 %v1409
    %1475 = vmatprep.subr.bf16.mxu0 %v1412
    %1476 = vmatpush1.bf16.msra.mxu0 %v1411
    %1477 = vmatprep.subr.bf16.mxu0 %v1414
    %1478 = vmatpush1.bf16.msra.mxu0 %v1413
    %1479 = vmatprep.subr.bf16.mxu0 %v1416
    %1480 = vmatpush1.bf16.msra.mxu0 %v1415
    %1481 = vmatprep.subr.bf16.mxu0 %v1418
    %1482 = vmatpush1.bf16.msra.mxu0 %v1417
    %1483 = vmatprep.subr.bf16.mxu0 %v1420
    %1484 = vmatpush1.bf16.msra.mxu0 %v1419
    %1485 = vmatprep.mubr.bf16.mxu0 %v1248
    %1486 = vmatmul.mubr.bf16.gmra.mrb[0].mxu0 %v1247
    %v1487 = vpop.f32.mrb[0].mxu0
    %v1488 = vadd.f32 %v1286, %v1487
    %v1489 = vpop.f32.mrb[0].mxu0
    %v1490 = vadd.f32 %v1290, %v1489
    %v1491 = vpop.f32.mrb[0].mxu0
    %v1492 = vpop.f32.mrb[0].mxu0
    %1493 = vdwg.mxu0
    %1494 = vst [vmem:[%s15] sm:$0xff] %v1488
    %1495 = vst [vmem:[%s16] sm:$0xff] %v1490
    %v1496 = vmul.f32 %v1490, 0.5
    %v1497 = vmul.f32 %v1496, 1.442695
    %v1498 = vpow.pop %v1497
    %v1499 = vld [vmem:[%s1] sm:$0xff]
    %v1500 = vmul.f32 %v1499, %v1498
    %v1501 = vadd.f32 %v1488, %v1500
    %v1502 = vpack.c.bf16 %v1501, %v1501
    %v1503 = vld [vmem:[%s8] sm:$0xff]
    %v1504 = vld [vmem:[%s8 + $0x8] sm:$0xff]
    %v1505 = vld [vmem:[%s8 + $0x10] sm:$0xff]
    %v1506 = vld [vmem:[%s8 + $0x18] sm:$0xff]
    %v1507 = vld [vmem:[%s8 + $0x20] sm:$0xff]
    %v1508 = vld [vmem:[%s8 + $0x28] sm:$0xff]
    %v1509 = vld [vmem:[%s8 + $0x30] sm:$0xff]
    %v1510 = vld [vmem:[%s8 + $0x38] sm:$0xff]
    %v1511 = vld [vmem:[%s8 + $0x40] sm:$0xff]
    %v1512 = vld [vmem:[%s8 + $0x48] sm:$0xff]
    %v1513 = vld [vmem:[%s8 + $0x50] sm:$0xff]
    %v1514 = vld [vmem:[%s8 + $0x58] sm:$0xff]
    %v1515 = vld [vmem:[%s8 + $0x60] sm:$0xff]
    %v1516 = vld [vmem:[%s8 + $0x68] sm:$0xff]
    %v1517 = vld [vmem:[%s8 + $0x70] sm:$0xff]
    %v1518 = vld [vmem:[%s8 + $0x78] sm:$0xff]
    %v1519 = vld [vmem:[%s9] sm:$0x3]
    %v1521 = vlaneseq
    %v1522 = vshrl.u32 %v1521, 7
    %v1523 = vsub.s32 0, %v1522
    %v1524 = vrot.slane %v1519, %v1523
    %v1525 = vlaneseq
    %v1526 = vshrl.u32 %v1525, 7
    %v1527 = vsub.s32 1, %v1526
    %v1528 = vrot.slane %v1519, %v1527
    %v1547 = vunpack.c.l.b16 %v1503
    %v1548 = vunpack.c.h.b16 %v1503
    %v1549 = vunpack.c.l.b16 %v1504
    %v1550 = vunpack.c.h.b16 %v1504
    %v1551 = vunpack.c.l.b16 %v1505
    %v1552 = vunpack.c.h.b16 %v1505
    %v1553 = vunpack.c.l.b16 %v1506
    %v1554 = vunpack.c.h.b16 %v1506
    %v1555 = vunpack.c.l.b16 %v1507
    %v1556 = vunpack.c.h.b16 %v1507
    %v1557 = vunpack.c.l.b16 %v1508
    %v1558 = vunpack.c.h.b16 %v1508
    %v1559 = vunpack.c.l.b16 %v1509
    %v1560 = vunpack.c.h.b16 %v1509
    %v1561 = vunpack.c.l.b16 %v1510
    %v1562 = vunpack.c.h.b16 %v1510
    %v1563 = vunpack.c.l.b16 %v1511
    %v1564 = vunpack.c.h.b16 %v1511
    %v1565 = vunpack.c.l.b16 %v1512
    %v1566 = vunpack.c.h.b16 %v1512
    %v1567 = vunpack.c.l.b16 %v1513
    %v1568 = vunpack.c.h.b16 %v1513
    %v1569 = vunpack.c.l.b16 %v1514
    %v1570 = vunpack.c.h.b16 %v1514
    %v1571 = vunpack.c.l.b16 %v1515
    %v1572 = vunpack.c.h.b16 %v1515
    %v1573 = vunpack.c.l.b16 %v1516
    %v1574 = vunpack.c.h.b16 %v1516
    %v1575 = vunpack.c.l.b16 %v1517
    %v1576 = vunpack.c.h.b16 %v1517
    %v1577 = vunpack.c.l.b16 %v1518
    %v1578 = vunpack.c.h.b16 %v1518
    %v1579 = vpack.c.b16 %v1549, %v1547
    %v1580 = vpack.c.b16 %v1550, %v1548
    %v1581 = vpack.c.b16 %v1553, %v1551
    %v1582 = vpack.c.b16 %v1554, %v1552
    %v1583 = vpack.c.b16 %v1557, %v1555
    %v1584 = vpack.c.b16 %v1558, %v1556
    %v1585 = vpack.c.b16 %v1561, %v1559
    %v1586 = vpack.c.b16 %v1562, %v1560
    %v1587 = vpack.c.b16 %v1565, %v1563
    %v1588 = vpack.c.b16 %v1566, %v1564
    %v1589 = vpack.c.b16 %v1569, %v1567
    %v1590 = vpack.c.b16 %v1570, %v1568
    %v1591 = vpack.c.b16 %v1573, %v1571
    %v1592 = vpack.c.b16 %v1574, %v1572
    %v1593 = vpack.c.b16 %v1577, %v1575
    %v1594 = vpack.c.b16 %v1578, %v1576
    %1611 = vmatprep.subr.bf16.mxu0 %v1580
    %1612 = vmatpush1.bf16.msra.mxu0 %v1579
    %1613 = vmatprep.subr.bf16.mxu0 %v1582
    %1614 = vmatpush1.bf16.msra.mxu0 %v1581
    %1615 = vmatprep.subr.bf16.mxu0 %v1584
    %1616 = vmatpush1.bf16.msra.mxu0 %v1583
    %1617 = vmatprep.subr.bf16.mxu0 %v1586
    %1618 = vmatpush1.bf16.msra.mxu0 %v1585
    %1619 = vmatprep.subr.bf16.mxu0 %v1588
    %1620 = vmatpush1.bf16.msra.mxu0 %v1587
    %1621 = vmatprep.subr.bf16.mxu0 %v1590
    %1622 = vmatpush1.bf16.msra.mxu0 %v1589
    %1623 = vmatprep.subr.bf16.mxu0 %v1592
    %1624 = vmatpush1.bf16.msra.mxu0 %v1591
    %1625 = vmatprep.subr.bf16.mxu0 %v1594
    %1626 = vmatpush1.bf16.msra.mxu0 %v1593
    %1627 = vmatprep.subr.bf16.mxu0 0
    %1628 = vmatpush1.bf16.msra.mxu0 0
    %1629 = vmatprep.subr.bf16.mxu0 0
    %1630 = vmatpush1.bf16.msra.mxu0 0
    %1631 = vmatprep.subr.bf16.mxu0 0
    %1632 = vmatpush1.bf16.msra.mxu0 0
    %1633 = vmatprep.subr.bf16.mxu0 0
    %1634 = vmatpush1.bf16.msra.mxu0 0
    %1635 = vmatprep.subr.bf16.mxu0 0
    %1636 = vmatpush1.bf16.msra.mxu0 0
    %1637 = vmatprep.subr.bf16.mxu0 0
    %1638 = vmatpush1.bf16.msra.mxu0 0
    %1639 = vmatprep.subr.bf16.mxu0 0
    %1640 = vmatpush1.bf16.msra.mxu0 0
    %1641 = vmatprep.subr.bf16.mxu0 0
    %1642 = vmatpush1.bf16.msra.mxu0 0
    %1643 = vmatprep.mubr.bf16.mxu0 0
    %1644 = vmatmul.mubr.bf16.gmra.mrb[0].mxu0 %v1502
    %v1645 = vpop.f32.mrb[0].mxu0
    %v1646 = vadd.f32 %v1524, %v1645
    %v1647 = vpop.f32.mrb[0].mxu0
    %v1648 = vadd.f32 %v1528, %v1647
    %v1649 = vpop.f32.mrb[0].mxu0
    %v1650 = vpop.f32.mrb[0].mxu0
    %1651 = vdwg.mxu0
    %v1652 = vpack.c.bf16 %v1646, %v1646
    %v1653 = vpack.c.bf16 %v1648, %v1648
    %v1654 = vld [vmem:[#allocation7] sm:$0xff]
    %v1655 = vld [vmem:[#allocation7 + $0x8] sm:$0xff]
    %v1656 = vld [vmem:[#allocation7 + $0x10] sm:$0xff]
    %v1657 = vld [vmem:[#allocation7 + $0x18] sm:$0xff]
    %v1658 = vld [vmem:[#allocation7 + $0x20] sm:$0xff]
    %v1659 = vld [vmem:[#allocation7 + $0x28] sm:$0xff]
    %v1660 = vld [vmem:[#allocation7 + $0x30] sm:$0xff]
    %v1661 = vld [vmem:[#allocation7 + $0x38] sm:$0xff]
    %v1662 = vld [vmem:[#allocation7 + $0x40] sm:$0xff]
    %v1663 = vld [vmem:[#allocation7 + $0x48] sm:$0xff]
    %v1664 = vld [vmem:[#allocation7 + $0x50] sm:$0xff]
    %v1665 = vld [vmem:[#allocation7 + $0x58] sm:$0xff]
    %v1666 = vld [vmem:[#allocation7 + $0x60] sm:$0xff]
    %v1667 = vld [vmem:[#allocation7 + $0x68] sm:$0xff]
    %v1668 = vld [vmem:[#allocation7 + $0x70] sm:$0xff]
    %v1669 = vld [vmem:[#allocation7 + $0x78] sm:$0xff]
    %v1670 = vld [vmem:[#allocation7 + $0x80] sm:$0xff]
    %v1671 = vld [vmem:[#allocation7 + $0x88] sm:$0xff]
    %v1672 = vld [vmem:[#allocation7 + $0x90] sm:$0xff]
    %v1673 = vld [vmem:[#allocation7 + $0x98] sm:$0xff]
    %v1674 = vld [vmem:[#allocation7 + $0xa0] sm:$0xff]
    %v1675 = vld [vmem:[#allocation7 + $0xa8] sm:$0xff]
    %v1676 = vld [vmem:[#allocation7 + $0xb0] sm:$0xff]
    %v1677 = vld [vmem:[#allocation7 + $0xb8] sm:$0xff]
    %v1678 = vld [vmem:[#allocation7 + $0xc0] sm:$0xff]
    %v1679 = vld [vmem:[#allocation7 + $0xc8] sm:$0xff]
    %v1680 = vld [vmem:[#allocation7 + $0xd0] sm:$0xff]
    %v1681 = vld [vmem:[#allocation7 + $0xd8] sm:$0xff]
    %v1682 = vld [vmem:[#allocation7 + $0xe0] sm:$0xff]
    %v1683 = vld [vmem:[#allocation7 + $0xe8] sm:$0xff]
    %v1684 = vld [vmem:[#allocation7 + $0xf0] sm:$0xff]
    %v1685 = vld [vmem:[#allocation7 + $0xf8] sm:$0xff]
    %v1686 = vld [vmem:[%s11] sm:$0x3]
    %v1688 = vlaneseq
    %v1689 = vshrl.u32 %v1688, 7
    %v1690 = vsub.s32 0, %v1689
    %v1691 = vrot.slane %v1686, %v1690
    %v1692 = vlaneseq
    %v1693 = vshrl.u32 %v1692, 7
    %v1694 = vsub.s32 1, %v1693
    %v1695 = vrot.slane %v1686, %v1694
    %v1730 = vunpack.c.l.b16 %v1654
    %v1731 = vunpack.c.h.b16 %v1654
    %v1732 = vunpack.c.l.b16 %v1655
    %v1733 = vunpack.c.h.b16 %v1655
    %v1734 = vunpack.c.l.b16 %v1656
    %v1735 = vunpack.c.h.b16 %v1656
    %v1736 = vunpack.c.l.b16 %v1657
    %v1737 = vunpack.c.h.b16 %v1657
    %v1738 = vunpack.c.l.b16 %v1658
    %v1739 = vunpack.c.h.b16 %v1658
    %v1740 = vunpack.c.l.b16 %v1659
    %v1741 = vunpack.c.h.b16 %v1659
    %v1742 = vunpack.c.l.b16 %v1660
    %v1743 = vunpack.c.h.b16 %v1660
    %v1744 = vunpack.c.l.b16 %v1661
    %v1745 = vunpack.c.h.b16 %v1661
    %v1746 = vunpack.c.l.b16 %v1662
    %v1747 = vunpack.c.h.b16 %v1662
    %v1748 = vunpack.c.l.b16 %v1663
    %v1749 = vunpack.c.h.b16 %v1663
    %v1750 = vunpack.c.l.b16 %v1664
    %v1751 = vunpack.c.h.b16 %v1664
    %v1752 = vunpack.c.l.b16 %v1665
    %v1753 = vunpack.c.h.b16 %v1665
    %v1754 = vunpack.c.l.b16 %v1666
    %v1755 = vunpack.c.h.b16 %v1666
    %v1756 = vunpack.c.l.b16 %v1667
    %v1757 = vunpack.c.h.b16 %v1667
    %v1758 = vunpack.c.l.b16 %v1668
    %v1759 = vunpack.c.h.b16 %v1668
    %v1760 = vunpack.c.l.b16 %v1669
    %v1761 = vunpack.c.h.b16 %v1669
    %v1762 = vunpack.c.l.b16 %v1670
    %v1763 = vunpack.c.h.b16 %v1670
    %v1764 = vunpack.c.l.b16 %v1671
    %v1765 = vunpack.c.h.b16 %v1671
    %v1766 = vunpack.c.l.b16 %v1672
    %v1767 = vunpack.c.h.b16 %v1672
    %v1768 = vunpack.c.l.b16 %v1673
    %v1769 = vunpack.c.h.b16 %v1673
    %v1770 = vunpack.c.l.b16 %v1674
    %v1771 = vunpack.c.h.b16 %v1674
    %v1772 = vunpack.c.l.b16 %v1675
    %v1773 = vunpack.c.h.b16 %v1675
    %v1774 = vunpack.c.l.b16 %v1676
    %v1775 = vunpack.c.h.b16 %v1676
    %v1776 = vunpack.c.l.b16 %v1677
    %v1777 = vunpack.c.h.b16 %v1677
    %v1778 = vunpack.c.l.b16 %v1678
    %v1779 = vunpack.c.h.b16 %v1678
    %v1780 = vunpack.c.l.b16 %v1679
    %v1781 = vunpack.c.h.b16 %v1679
    %v1782 = vunpack.c.l.b16 %v1680
    %v1783 = vunpack.c.h.b16 %v1680
    %v1784 = vunpack.c.l.b16 %v1681
    %v1785 = vunpack.c.h.b16 %v1681
    %v1786 = vunpack.c.l.b16 %v1682
    %v1787 = vunpack.c.h.b16 %v1682
    %v1788 = vunpack.c.l.b16 %v1683
    %v1789 = vunpack.c.h.b16 %v1683
    %v1790 = vunpack.c.l.b16 %v1684
    %v1791 = vunpack.c.h.b16 %v1684
    %v1792 = vunpack.c.l.b16 %v1685
    %v1793 = vunpack.c.h.b16 %v1685
    %v1794 = vpack.c.b16 %v1732, %v1730
    %v1795 = vpack.c.b16 %v1733, %v1731
    %v1796 = vpack.c.b16 %v1736, %v1734
    %v1797 = vpack.c.b16 %v1737, %v1735
    %v1798 = vpack.c.b16 %v1740, %v1738
    %v1799 = vpack.c.b16 %v1741, %v1739
    %v1800 = vpack.c.b16 %v1744, %v1742
    %v1801 = vpack.c.b16 %v1745, %v1743
    %v1802 = vpack.c.b16 %v1748, %v1746
    %v1803 = vpack.c.b16 %v1749, %v1747
    %v1804 = vpack.c.b16 %v1752, %v1750
    %v1805 = vpack.c.b16 %v1753, %v1751
    %v1806 = vpack.c.b16 %v1756, %v1754
    %v1807 = vpack.c.b16 %v1757, %v1755
    %v1808 = vpack.c.b16 %v1760, %v1758
    %v1809 = vpack.c.b16 %v1761, %v1759
    %v1810 = vpack.c.b16 %v1764, %v1762
    %v1811 = vpack.c.b16 %v1765, %v1763
    %v1812 = vpack.c.b16 %v1768, %v1766
    %v1813 = vpack.c.b16 %v1769, %v1767
    %v1814 = vpack.c.b16 %v1772, %v1770
    %v1815 = vpack.c.b16 %v1773, %v1771
    %v1816 = vpack.c.b16 %v1776, %v1774
    %v1817 = vpack.c.b16 %v1777, %v1775
    %v1818 = vpack.c.b16 %v1780, %v1778
    %v1819 = vpack.c.b16 %v1781, %v1779
    %v1820 = vpack.c.b16 %v1784, %v1782
    %v1821 = vpack.c.b16 %v1785, %v1783
    %v1822 = vpack.c.b16 %v1788, %v1786
    %v1823 = vpack.c.b16 %v1789, %v1787
    %v1824 = vpack.c.b16 %v1792, %v1790
    %v1825 = vpack.c.b16 %v1793, %v1791
    %1858 = vmatprep.subr.bf16.mxu0 %v1795
    %1859 = vmatpush1.bf16.msra.mxu0 %v1794
    %1860 = vmatprep.subr.bf16.mxu0 %v1797
    %1861 = vmatpush1.bf16.msra.mxu0 %v1796
    %1862 = vmatprep.subr.bf16.mxu0 %v1799
    %1863 = vmatpush1.bf16.msra.mxu0 %v1798
    %1864 = vmatprep.subr.bf16.mxu0 %v1801
    %1865 = vmatpush1.bf16.msra.mxu0 %v1800
    %1866 = vmatprep.subr.bf16.mxu0 %v1803
    %1867 = vmatpush1.bf16.msra.mxu0 %v1802
    %1868 = vmatprep.subr.bf16.mxu0 %v1805
    %1869 = vmatpush1.bf16.msra.mxu0 %v1804
    %1870 = vmatprep.subr.bf16.mxu0 %v1807
    %1871 = vmatpush1.bf16.msra.mxu0 %v1806
    %1872 = vmatprep.subr.bf16.mxu0 %v1809
    %1873 = vmatpush1.bf16.msra.mxu0 %v1808
    %1874 = vmatprep.subr.bf16.mxu0 %v1811
    %1875 = vmatpush1.bf16.msra.mxu0 %v1810
    %1876 = vmatprep.subr.bf16.mxu0 %v1813
    %1877 = vmatpush1.bf16.msra.mxu0 %v1812
    %1878 = vmatprep.subr.bf16.mxu0 %v1815
    %1879 = vmatpush1.bf16.msra.mxu0 %v1814
    %1880 = vmatprep.subr.bf16.mxu0 %v1817
    %1881 = vmatpush1.bf16.msra.mxu0 %v1816
    %1882 = vmatprep.subr.bf16.mxu0 %v1819
    %1883 = vmatpush1.bf16.msra.mxu0 %v1818
    %1884 = vmatprep.subr.bf16.mxu0 %v1821
    %1885 = vmatpush1.bf16.msra.mxu0 %v1820
    %1886 = vmatprep.subr.bf16.mxu0 %v1823
    %1887 = vmatpush1.bf16.msra.mxu0 %v1822
    %1888 = vmatprep.subr.bf16.mxu0 %v1825
    %1889 = vmatpush1.bf16.msra.mxu0 %v1824
    %1890 = vmatprep.mubr.bf16.mxu0 %v1653
    %1891 = vmatmul.mubr.bf16.gmra.mrb[0].mxu0 %v1652
    %v1892 = vpop.f32.mrb[0].mxu0
    %v1893 = vadd.f32 %v1691, %v1892
    %v1894 = vpop.f32.mrb[0].mxu0
    %v1895 = vadd.f32 %v1695, %v1894
    %v1896 = vpop.f32.mrb[0].mxu0
    %v1897 = vpop.f32.mrb[0].mxu0
    %1898 = vdwg.mxu0
    %v1899 = vmax.f32 %v1893, 0.0
    %v1900 = vmax.f32 %v1895, 0.0
    %v1901 = vpack.c.bf16 %v1899, %v1899
    %v1902 = vpack.c.bf16 %v1900, %v1900
    %v1903 = vld [vmem:[#allocation9] sm:$0xff]
    %v1904 = vld [vmem:[#allocation9 + $0x8] sm:$0xff]
    %v1905 = vld [vmem:[#allocation9 + $0x10] sm:$0xff]
    %v1906 = vld [vmem:[#allocation9 + $0x18] sm:$0xf]
    %v1907 = vld [vmem:[#allocation9 + $0x1c] sm:$0xff]
    %v1908 = vld [vmem:[#allocation9 + $0x24] sm:$0xff]
    %v1909 = vld [vmem:[#allocation9 + $0x2c] sm:$0xff]
    %v1910 = vld [vmem:[#allocation9 + $0x34] sm:$0xf]
    %v1911 = vld [vmem:[#allocation9 + $0x38] sm:$0xff]
    %v1912 = vld [vmem:[#allocation9 + $0x40] sm:$0xff]
    %v1913 = vld [vmem:[#allocation9 + $0x48] sm:$0xff]
    %v1914 = vld [vmem:[#allocation9 + $0x50] sm:$0xf]
    %v1915 = vld [vmem:[#allocation9 + $0x54] sm:$0xff]
    %v1916 = vld [vmem:[#allocation9 + $0x5c] sm:$0xff]
    %v1917 = vld [vmem:[#allocation9 + $0x64] sm:$0xff]
    %v1918 = vld [vmem:[#allocation9 + $0x6c] sm:$0xf]
    %v1919 = vld [vmem:[#allocation9 + $0x70] sm:$0xff]
    %v1920 = vld [vmem:[#allocation9 + $0x78] sm:$0xff]
    %v1921 = vld [vmem:[#allocation9 + $0x80] sm:$0xff]
    %v1922 = vld [vmem:[#allocation9 + $0x88] sm:$0xf]
    %v1923 = vld [vmem:[#allocation9 + $0x8c] sm:$0xff]
    %v1924 = vld [vmem:[#allocation9 + $0x94] sm:$0xff]
    %v1925 = vld [vmem:[#allocation9 + $0x9c] sm:$0xff]
    %v1926 = vld [vmem:[#allocation9 + $0xa4] sm:$0xf]
    %v1927 = vld [vmem:[#allocation9 + $0xa8] sm:$0xff]
    %v1928 = vld [vmem:[#allocation9 + $0xb0] sm:$0xff]
    %v1929 = vld [vmem:[#allocation9 + $0xb8] sm:$0xff]
    %v1930 = vld [vmem:[#allocation9 + $0xc0] sm:$0xf]
    %v1931 = vld [vmem:[#allocation9 + $0xc4] sm:$0xff]
    %v1932 = vld [vmem:[#allocation9 + $0xcc] sm:$0xff]
    %v1933 = vld [vmem:[#allocation9 + $0xd4] sm:$0xff]
    %v1934 = vld [vmem:[#allocation9 + $0xdc] sm:$0xf]
    %v1935 = vld [vmem:[#allocation9 + $0xe0] sm:$0xff]
    %v1936 = vld [vmem:[#allocation9 + $0xe8] sm:$0xff]
    %v1937 = vld [vmem:[#allocation9 + $0xf0] sm:$0xff]
    %v1938 = vld [vmem:[#allocation9 + $0xf8] sm:$0xf]
    %v1939 = vld [vmem:[#allocation9 + $0xfc] sm:$0xff]
    %v1940 = vld [vmem:[#allocation9 + $0x104] sm:$0xff]
    %v1941 = vld [vmem:[#allocation9 + $0x10c] sm:$0xff]
    %v1942 = vld [vmem:[#allocation9 + $0x114] sm:$0xf]
    %v1943 = vld [vmem:[#allocation9 + $0x118] sm:$0xff]
    %v1944 = vld [vmem:[#allocation9 + $0x120] sm:$0xff]
    %v1945 = vld [vmem:[#allocation9 + $0x128] sm:$0xff]
    %v1946 = vld [vmem:[#allocation9 + $0x130] sm:$0xf]
    %v1947 = vld [vmem:[#allocation9 + $0x134] sm:$0xff]
    %v1948 = vld [vmem:[#allocation9 + $0x13c] sm:$0xff]
    %v1949 = vld [vmem:[#allocation9 + $0x144] sm:$0xff]
    %v1950 = vld [vmem:[#allocation9 + $0x14c] sm:$0xf]
    %v1951 = vld [vmem:[#allocation9 + $0x150] sm:$0xff]
    %v1952 = vld [vmem:[#allocation9 + $0x158] sm:$0xff]
    %v1953 = vld [vmem:[#allocation9 + $0x160] sm:$0xff]
    %v1954 = vld [vmem:[#allocation9 + $0x168] sm:$0xf]
    %v1955 = vld [vmem:[#allocation9 + $0x16c] sm:$0xff]
    %v1956 = vld [vmem:[#allocation9 + $0x174] sm:$0xff]
    %v1957 = vld [vmem:[#allocation9 + $0x17c] sm:$0xff]
    %v1958 = vld [vmem:[#allocation9 + $0x184] sm:$0xf]
    %v1959 = vld [vmem:[#allocation9 + $0x188] sm:$0xff]
    %v1960 = vld [vmem:[#allocation9 + $0x190] sm:$0xff]
    %v1961 = vld [vmem:[#allocation9 + $0x198] sm:$0xff]
    %v1962 = vld [vmem:[#allocation9 + $0x1a0] sm:$0xf]
    %v1963 = vld [vmem:[#allocation9 + $0x1a4] sm:$0xff]
    %v1964 = vld [vmem:[#allocation9 + $0x1ac] sm:$0xff]
    %v1965 = vld [vmem:[#allocation9 + $0x1b4] sm:$0xff]
    %v1966 = vld [vmem:[#allocation9 + $0x1bc] sm:$0xf]
    %v1967 = vld [vmem:[#allocation9 + $0x1c0] sm:$0xff]
    %v1968 = vld [vmem:[#allocation9 + $0x1c8] sm:$0xff]
    %v1969 = vld [vmem:[#allocation9 + $0x1d0] sm:$0xff]
    %v1970 = vld [vmem:[#allocation9 + $0x1d8] sm:$0xf]
    %v1971 = vld [vmem:[#allocation9 + $0x1dc] sm:$0xff]
    %v1972 = vld [vmem:[#allocation9 + $0x1e4] sm:$0xff]
    %v1973 = vld [vmem:[#allocation9 + $0x1ec] sm:$0xff]
    %v1974 = vld [vmem:[#allocation9 + $0x1f4] sm:$0xf]
    %v1975 = vld [vmem:[#allocation9 + $0x1f8] sm:$0xff]
    %v1976 = vld [vmem:[#allocation9 + $0x200] sm:$0xff]
    %v1977 = vld [vmem:[#allocation9 + $0x208] sm:$0xff]
    %v1978 = vld [vmem:[#allocation9 + $0x210] sm:$0xf]
    %v1979 = vld [vmem:[#allocation9 + $0x214] sm:$0xff]
    %v1980 = vld [vmem:[#allocation9 + $0x21c] sm:$0xff]
    %v1981 = vld [vmem:[#allocation9 + $0x224] sm:$0xff]
    %v1982 = vld [vmem:[#allocation9 + $0x22c] sm:$0xf]
    %v1983 = vld [vmem:[#allocation9 + $0x230] sm:$0xff]
    %v1984 = vld [vmem:[#allocation9 + $0x238] sm:$0xff]
    %v1985 = vld [vmem:[#allocation9 + $0x240] sm:$0xff]
    %v1986 = vld [vmem:[#allocation9 + $0x248] sm:$0xf]
    %v1987 = vld [vmem:[#allocation9 + $0x24c] sm:$0xff]
    %v1988 = vld [vmem:[#allocation9 + $0x254] sm:$0xff]
    %v1989 = vld [vmem:[#allocation9 + $0x25c] sm:$0xff]
    %v1990 = vld [vmem:[#allocation9 + $0x264] sm:$0xf]
    %v1991 = vld [vmem:[#allocation9 + $0x268] sm:$0xff]
    %v1992 = vld [vmem:[#allocation9 + $0x270] sm:$0xff]
    %v1993 = vld [vmem:[#allocation9 + $0x278] sm:$0xff]
    %v1994 = vld [vmem:[#allocation9 + $0x280] sm:$0xf]
    %v1995 = vld [vmem:[#allocation9 + $0x284] sm:$0xff]
    %v1996 = vld [vmem:[#allocation9 + $0x28c] sm:$0xff]
    %v1997 = vld [vmem:[#allocation9 + $0x294] sm:$0xff]
    %v1998 = vld [vmem:[#allocation9 + $0x29c] sm:$0xf]
    %v1999 = vld [vmem:[#allocation9 + $0x2a0] sm:$0xff]
    %v2000 = vld [vmem:[#allocation9 + $0x2a8] sm:$0xff]
    %v2001 = vld [vmem:[#allocation9 + $0x2b0] sm:$0xff]
    %v2002 = vld [vmem:[#allocation9 + $0x2b8] sm:$0xf]
    %v2003 = vld [vmem:[#allocation9 + $0x2bc] sm:$0xff]
    %v2004 = vld [vmem:[#allocation9 + $0x2c4] sm:$0xff]
    %v2005 = vld [vmem:[#allocation9 + $0x2cc] sm:$0xff]
    %v2006 = vld [vmem:[#allocation9 + $0x2d4] sm:$0xf]
    %v2007 = vld [vmem:[#allocation9 + $0x2d8] sm:$0xff]
    %v2008 = vld [vmem:[#allocation9 + $0x2e0] sm:$0xff]
    %v2009 = vld [vmem:[#allocation9 + $0x2e8] sm:$0xff]
    %v2010 = vld [vmem:[#allocation9 + $0x2f0] sm:$0xf]
    %v2011 = vld [vmem:[#allocation9 + $0x2f4] sm:$0xff]
    %v2012 = vld [vmem:[#allocation9 + $0x2fc] sm:$0xff]
    %v2013 = vld [vmem:[#allocation9 + $0x304] sm:$0xff]
    %v2014 = vld [vmem:[#allocation9 + $0x30c] sm:$0xf]
    %v2015 = vld [vmem:[#allocation9 + $0x310] sm:$0xff]
    %v2016 = vld [vmem:[#allocation9 + $0x318] sm:$0xff]
    %v2017 = vld [vmem:[#allocation9 + $0x320] sm:$0xff]
    %v2018 = vld [vmem:[#allocation9 + $0x328] sm:$0xf]
    %v2019 = vld [vmem:[#allocation9 + $0x32c] sm:$0xff]
    %v2020 = vld [vmem:[#allocation9 + $0x334] sm:$0xff]
    %v2021 = vld [vmem:[#allocation9 + $0x33c] sm:$0xff]
    %v2022 = vld [vmem:[#allocation9 + $0x344] sm:$0xf]
    %v2023 = vld [vmem:[#allocation9 + $0x348] sm:$0xff]
    %v2024 = vld [vmem:[#allocation9 + $0x350] sm:$0xff]
    %v2025 = vld [vmem:[#allocation9 + $0x358] sm:$0xff]
    %v2026 = vld [vmem:[#allocation9 + $0x360] sm:$0xf]
    %v2027 = vld [vmem:[#allocation9 + $0x364] sm:$0xff]
    %v2028 = vld [vmem:[#allocation9 + $0x36c] sm:$0xff]
    %v2029 = vld [vmem:[#allocation9 + $0x374] sm:$0xff]
    %v2030 = vld [vmem:[#allocation9 + $0x37c] sm:$0xf]
    %v2031 = vld [vmem:[%s13] sm:$0xff]
    %v2033 = vlaneseq
    %v2034 = vshrl.u32 %v2033, 7
    %v2035 = vsub.s32 0, %v2034
    %v2036 = vrot.slane %v2031, %v2035
    %v2037 = vlaneseq
    %v2038 = vshrl.u32 %v2037, 7
    %v2039 = vsub.s32 1, %v2038
    %v2040 = vrot.slane %v2031, %v2039
    %v2041 = vlaneseq
    %v2042 = vshrl.u32 %v2041, 7
    %v2043 = vsub.s32 2, %v2042
    %v2044 = vrot.slane %v2031, %v2043
    %v2045 = vlaneseq
    %v2046 = vshrl.u32 %v2045, 7
    %v2047 = vsub.s32 3, %v2046
    %v2048 = vrot.slane %v2031, %v2047
    %v2049 = vlaneseq
    %v2050 = vshrl.u32 %v2049, 7
    %v2051 = vsub.s32 4, %v2050
    %v2052 = vrot.slane %v2031, %v2051
    %v2053 = vlaneseq
    %v2054 = vshrl.u32 %v2053, 7
    %v2055 = vsub.s32 5, %v2054
    %v2056 = vrot.slane %v2031, %v2055
    %v2057 = vlaneseq
    %v2058 = vshrl.u32 %v2057, 7
    %v2059 = vsub.s32 6, %v2058
    %v2060 = vrot.slane %v2031, %v2059
    %v2196 = vunpack.c.l.b16 %v1903
    %v2197 = vunpack.c.h.b16 %v1903
    %v2198 = vunpack.c.l.b16 %v1904
    %v2199 = vunpack.c.h.b16 %v1904
    %v2200 = vunpack.c.l.b16 %v1905
    %v2201 = vunpack.c.h.b16 %v1905
    %v2202 = vunpack.c.l.b16 %v1906
    %v2203 = vunpack.c.l.b16 %v1907
    %v2204 = vunpack.c.h.b16 %v1907
    %v2205 = vunpack.c.l.b16 %v1908
    %v2206 = vunpack.c.h.b16 %v1908
    %v2207 = vunpack.c.l.b16 %v1909
    %v2208 = vunpack.c.h.b16 %v1909
    %v2209 = vunpack.c.l.b16 %v1910
    %v2210 = vunpack.c.l.b16 %v1911
    %v2211 = vunpack.c.h.b16 %v1911
    %v2212 = vunpack.c.l.b16 %v1912
    %v2213 = vunpack.c.h.b16 %v1912
    %v2214 = vunpack.c.l.b16 %v1913
    %v2215 = vunpack.c.h.b16 %v1913
    %v2216 = vunpack.c.l.b16 %v1914
    %v2217 = vunpack.c.l.b16 %v1915
    %v2218 = vunpack.c.h.b16 %v1915
    %v2219 = vunpack.c.l.b16 %v1916
    %v2220 = vunpack.c.h.b16 %v1916
    %v2221 = vunpack.c.l.b16 %v1917
    %v2222 = vunpack.c.h.b16 %v1917
    %v2223 = vunpack.c.l.b16 %v1918
    %v2224 = vunpack.c.l.b16 %v1919
    %v2225 = vunpack.c.h.b16 %v1919
    %v2226 = vunpack.c.l.b16 %v1920
    %v2227 = vunpack.c.h.b16 %v1920
    %v2228 = vunpack.c.l.b16 %v1921
    %v2229 = vunpack.c.h.b16 %v1921
    %v2230 = vunpack.c.l.b16 %v1922
    %v2231 = vunpack.c.l.b16 %v1923
    %v2232 = vunpack.c.h.b16 %v1923
    %v2233 = vunpack.c.l.b16 %v1924
    %v2234 = vunpack.c.h.b16 %v1924
    %v2235 = vunpack.c.l.b16 %v1925
    %v2236 = vunpack.c.h.b16 %v1925
    %v2237 = vunpack.c.l.b16 %v1926
    %v2238 = vunpack.c.l.b16 %v1927
    %v2239 = vunpack.c.h.b16 %v1927
    %v2240 = vunpack.c.l.b16 %v1928
    %v2241 = vunpack.c.h.b16 %v1928
    %v2242 = vunpack.c.l.b16 %v1929
    %v2243 = vunpack.c.h.b16 %v1929
    %v2244 = vunpack.c.l.b16 %v1930
    %v2245 = vunpack.c.l.b16 %v1931
    %v2246 = vunpack.c.h.b16 %v1931
    %v2247 = vunpack.c.l.b16 %v1932
    %v2248 = vunpack.c.h.b16 %v1932
    %v2249 = vunpack.c.l.b16 %v1933
    %v2250 = vunpack.c.h.b16 %v1933
    %v2251 = vunpack.c.l.b16 %v1934
    %v2252 = vunpack.c.l.b16 %v1935
    %v2253 = vunpack.c.h.b16 %v1935
    %v2254 = vunpack.c.l.b16 %v1936
    %v2255 = vunpack.c.h.b16 %v1936
    %v2256 = vunpack.c.l.b16 %v1937
    %v2257 = vunpack.c.h.b16 %v1937
    %v2258 = vunpack.c.l.b16 %v1938
    %v2259 = vunpack.c.l.b16 %v1939
    %v2260 = vunpack.c.h.b16 %v1939
    %v2261 = vunpack.c.l.b16 %v1940
    %v2262 = vunpack.c.h.b16 %v1940
    %v2263 = vunpack.c.l.b16 %v1941
    %v2264 = vunpack.c.h.b16 %v1941
    %v2265 = vunpack.c.l.b16 %v1942
    %v2266 = vunpack.c.l.b16 %v1943
    %v2267 = vunpack.c.h.b16 %v1943
    %v2268 = vunpack.c.l.b16 %v1944
    %v2269 = vunpack.c.h.b16 %v1944
    %v2270 = vunpack.c.l.b16 %v1945
    %v2271 = vunpack.c.h.b16 %v1945
    %v2272 = vunpack.c.l.b16 %v1946
    %v2273 = vunpack.c.l.b16 %v1947
    %v2274 = vunpack.c.h.b16 %v1947
    %v2275 = vunpack.c.l.b16 %v1948
    %v2276 = vunpack.c.h.b16 %v1948
    %v2277 = vunpack.c.l.b16 %v1949
    %v2278 = vunpack.c.h.b16 %v1949
    %v2279 = vunpack.c.l.b16 %v1950
    %v2280 = vunpack.c.l.b16 %v1951
    %v2281 = vunpack.c.h.b16 %v1951
    %v2282 = vunpack.c.l.b16 %v1952
    %v2283 = vunpack.c.h.b16 %v1952
    %v2284 = vunpack.c.l.b16 %v1953
    %v2285 = vunpack.c.h.b16 %v1953
    %v2286 = vunpack.c.l.b16 %v1954
    %v2287 = vunpack.c.l.b16 %v1955
    %v2288 = vunpack.c.h.b16 %v1955
    %v2289 = vunpack.c.l.b16 %v1956
    %v2290 = vunpack.c.h.b16 %v1956
    %v2291 = vunpack.c.l.b16 %v1957
    %v2292 = vunpack.c.h.b16 %v1957
    %v2293 = vunpack.c.l.b16 %v1958
    %v2294 = vunpack.c.l.b16 %v1959
    %v2295 = vunpack.c.h.b16 %v1959
    %v2296 = vunpack.c.l.b16 %v1960
    %v2297 = vunpack.c.h.b16 %v1960
    %v2298 = vunpack.c.l.b16 %v1961
    %v2299 = vunpack.c.h.b16 %v1961
    %v2300 = vunpack.c.l.b16 %v1962
    %v2301 = vunpack.c.l.b16 %v1963
    %v2302 = vunpack.c.h.b16 %v1963
    %v2303 = vunpack.c.l.b16 %v1964
    %v2304 = vunpack.c.h.b16 %v1964
    %v2305 = vunpack.c.l.b16 %v1965
    %v2306 = vunpack.c.h.b16 %v1965
    %v2307 = vunpack.c.l.b16 %v1966
    %v2308 = vunpack.c.l.b16 %v1967
    %v2309 = vunpack.c.h.b16 %v1967
    %v2310 = vunpack.c.l.b16 %v1968
    %v2311 = vunpack.c.h.b16 %v1968
    %v2312 = vunpack.c.l.b16 %v1969
    %v2313 = vunpack.c.h.b16 %v1969
    %v2314 = vunpack.c.l.b16 %v1970
    %v2315 = vunpack.c.l.b16 %v1971
    %v2316 = vunpack.c.h.b16 %v1971
    %v2317 = vunpack.c.l.b16 %v1972
    %v2318 = vunpack.c.h.b16 %v1972
    %v2319 = vunpack.c.l.b16 %v1973
    %v2320 = vunpack.c.h.b16 %v1973
    %v2321 = vunpack.c.l.b16 %v1974
    %v2322 = vunpack.c.l.b16 %v1975
    %v2323 = vunpack.c.h.b16 %v1975
    %v2324 = vunpack.c.l.b16 %v1976
    %v2325 = vunpack.c.h.b16 %v1976
    %v2326 = vunpack.c.l.b16 %v1977
    %v2327 = vunpack.c.h.b16 %v1977
    %v2328 = vunpack.c.l.b16 %v1978
    %v2329 = vunpack.c.l.b16 %v1979
    %v2330 = vunpack.c.h.b16 %v1979
    %v2331 = vunpack.c.l.b16 %v1980
    %v2332 = vunpack.c.h.b16 %v1980
    %v2333 = vunpack.c.l.b16 %v1981
    %v2334 = vunpack.c.h.b16 %v1981
    %v2335 = vunpack.c.l.b16 %v1982
    %v2336 = vunpack.c.l.b16 %v1983
    %v2337 = vunpack.c.h.b16 %v1983
    %v2338 = vunpack.c.l.b16 %v1984
    %v2339 = vunpack.c.h.b16 %v1984
    %v2340 = vunpack.c.l.b16 %v1985
    %v2341 = vunpack.c.h.b16 %v1985
    %v2342 = vunpack.c.l.b16 %v1986
    %v2343 = vunpack.c.l.b16 %v1987
    %v2344 = vunpack.c.h.b16 %v1987
    %v2345 = vunpack.c.l.b16 %v1988
    %v2346 = vunpack.c.h.b16 %v1988
    %v2347 = vunpack.c.l.b16 %v1989
    %v2348 = vunpack.c.h.b16 %v1989
    %v2349 = vunpack.c.l.b16 %v1990
    %v2350 = vunpack.c.l.b16 %v1991
    %v2351 = vunpack.c.h.b16 %v1991
    %v2352 = vunpack.c.l.b16 %v1992
    %v2353 = vunpack.c.h.b16 %v1992
    %v2354 = vunpack.c.l.b16 %v1993
    %v2355 = vunpack.c.h.b16 %v1993
    %v2356 = vunpack.c.l.b16 %v1994
    %v2357 = vunpack.c.l.b16 %v1995
    %v2358 = vunpack.c.h.b16 %v1995
    %v2359 = vunpack.c.l.b16 %v1996
    %v2360 = vunpack.c.h.b16 %v1996
    %v2361 = vunpack.c.l.b16 %v1997
    %v2362 = vunpack.c.h.b16 %v1997
    %v2363 = vunpack.c.l.b16 %v1998
    %v2364 = vunpack.c.l.b16 %v1999
    %v2365 = vunpack.c.h.b16 %v1999
    %v2366 = vunpack.c.l.b16 %v2000
    %v2367 = vunpack.c.h.b16 %v2000
    %v2368 = vunpack.c.l.b16 %v2001
    %v2369 = vunpack.c.h.b16 %v2001
    %v2370 = vunpack.c.l.b16 %v2002
    %v2371 = vunpack.c.l.b16 %v2003
    %v2372 = vunpack.c.h.b16 %v2003
    %v2373 = vunpack.c.l.b16 %v2004
    %v2374 = vunpack.c.h.b16 %v2004
    %v2375 = vunpack.c.l.b16 %v2005
    %v2376 = vunpack.c.h.b16 %v2005
    %v2377 = vunpack.c.l.b16 %v2006
    %v2378 = vunpack.c.l.b16 %v2007
    %v2379 = vunpack.c.h.b16 %v2007
    %v2380 = vunpack.c.l.b16 %v2008
    %v2381 = vunpack.c.h.b16 %v2008
    %v2382 = vunpack.c.l.b16 %v2009
    %v2383 = vunpack.c.h.b16 %v2009
    %v2384 = vunpack.c.l.b16 %v2010
    %v2385 = vunpack.c.l.b16 %v2011
    %v2386 = vunpack.c.h.b16 %v2011
    %v2387 = vunpack.c.l.b16 %v2012
    %v2388 = vunpack.c.h.b16 %v2012
    %v2389 = vunpack.c.l.b16 %v2013
    %v2390 = vunpack.c.h.b16 %v2013
    %v2391 = vunpack.c.l.b16 %v2014
    %v2392 = vunpack.c.l.b16 %v2015
    %v2393 = vunpack.c.h.b16 %v2015
    %v2394 = vunpack.c.l.b16 %v2016
    %v2395 = vunpack.c.h.b16 %v2016
    %v2396 = vunpack.c.l.b16 %v2017
    %v2397 = vunpack.c.h.b16 %v2017
    %v2398 = vunpack.c.l.b16 %v2018
    %v2399 = vunpack.c.l.b16 %v2019
    %v2400 = vunpack.c.h.b16 %v2019
    %v2401 = vunpack.c.l.b16 %v2020
    %v2402 = vunpack.c.h.b16 %v2020
    %v2403 = vunpack.c.l.b16 %v2021
    %v2404 = vunpack.c.h.b16 %v2021
    %v2405 = vunpack.c.l.b16 %v2022
    %v2406 = vunpack.c.l.b16 %v2023
    %v2407 = vunpack.c.h.b16 %v2023
    %v2408 = vunpack.c.l.b16 %v2024
    %v2409 = vunpack.c.h.b16 %v2024
    %v2410 = vunpack.c.l.b16 %v2025
    %v2411 = vunpack.c.h.b16 %v2025
    %v2412 = vunpack.c.l.b16 %v2026
    %v2413 = vunpack.c.l.b16 %v2027
    %v2414 = vunpack.c.h.b16 %v2027
    %v2415 = vunpack.c.l.b16 %v2028
    %v2416 = vunpack.c.h.b16 %v2028
    %v2417 = vunpack.c.l.b16 %v2029
    %v2418 = vunpack.c.h.b16 %v2029
    %v2419 = vunpack.c.l.b16 %v2030
    %v2420 = vpack.c.b16 %v2203, %v2196
    %v2421 = vpack.c.b16 %v2204, %v2197
    %v2422 = vpack.c.b16 %v2205, %v2198
    %v2423 = vpack.c.b16 %v2206, %v2199
    %v2424 = vpack.c.b16 %v2207, %v2200
    %v2425 = vpack.c.b16 %v2208, %v2201
    %v2426 = vpack.c.b16 %v2209, %v2202
    %v2427 = vpack.c.b16 %v2217, %v2210
    %v2428 = vpack.c.b16 %v2218, %v2211
    %v2429 = vpack.c.b16 %v2219, %v2212
    %v2430 = vpack.c.b16 %v2220, %v2213
    %v2431 = vpack.c.b16 %v2221, %v2214
    %v2432 = vpack.c.b16 %v2222, %v2215
    %v2433 = vpack.c.b16 %v2223, %v2216
    %v2434 = vpack.c.b16 %v2231, %v2224
    %v2435 = vpack.c.b16 %v2232, %v2225
    %v2436 = vpack.c.b16 %v2233, %v2226
    %v2437 = vpack.c.b16 %v2234, %v2227
    %v2438 = vpack.c.b16 %v2235, %v2228
    %v2439 = vpack.c.b16 %v2236, %v2229
    %v2440 = vpack.c.b16 %v2237, %v2230
    %v2441 = vpack.c.b16 %v2245, %v2238
    %v2442 = vpack.c.b16 %v2246, %v2239
    %v2443 = vpack.c.b16 %v2247, %v2240
    %v2444 = vpack.c.b16 %v2248, %v2241
    %v2445 = vpack.c.b16 %v2249, %v2242
    %v2446 = vpack.c.b16 %v2250, %v2243
    %v2447 = vpack.c.b16 %v2251, %v2244
    %v2448 = vpack.c.b16 %v2259, %v2252
    %v2449 = vpack.c.b16 %v2260, %v2253
    %v2450 = vpack.c.b16 %v2261, %v2254
    %v2451 = vpack.c.b16 %v2262, %v2255
    %v2452 = vpack.c.b16 %v2263, %v2256
    %v2453 = vpack.c.b16 %v2264, %v2257
    %v2454 = vpack.c.b16 %v2265, %v2258
    %v2455 = vpack.c.b16 %v2273, %v2266
    %v2456 = vpack.c.b16 %v2274, %v2267
    %v2457 = vpack.c.b16 %v2275, %v2268
    %v2458 = vpack.c.b16 %v2276, %v2269
    %v2459 = vpack.c.b16 %v2277, %v2270
    %v2460 = vpack.c.b16 %v2278, %v2271
    %v2461 = vpack.c.b16 %v2279, %v2272
    %v2462 = vpack.c.b16 %v2287, %v2280
    %v2463 = vpack.c.b16 %v2288, %v2281
    %v2464 = vpack.c.b16 %v2289, %v2282
    %v2465 = vpack.c.b16 %v2290, %v2283
    %v2466 = vpack.c.b16 %v2291, %v2284
    %v2467 = vpack.c.b16 %v2292, %v2285
    %v2468 = vpack.c.b16 %v2293, %v2286
    %v2469 = vpack.c.b16 %v2301, %v2294
    %v2470 = vpack.c.b16 %v2302, %v2295
    %v2471 = vpack.c.b16 %v2303, %v2296
    %v2472 = vpack.c.b16 %v2304, %v2297
    %v2473 = vpack.c.b16 %v2305, %v2298
    %v2474 = vpack.c.b16 %v2306, %v2299
    %v2475 = vpack.c.b16 %v2307, %v2300
    %v2476 = vpack.c.b16 %v2315, %v2308
    %v2477 = vpack.c.b16 %v2316, %v2309
    %v2478 = vpack.c.b16 %v2317, %v2310
    %v2479 = vpack.c.b16 %v2318, %v2311
    %v2480 = vpack.c.b16 %v2319, %v2312
    %v2481 = vpack.c.b16 %v2320, %v2313
    %v2482 = vpack.c.b16 %v2321, %v2314
    %v2483 = vpack.c.b16 %v2329, %v2322
    %v2484 = vpack.c.b16 %v2330, %v2323
    %v2485 = vpack.c.b16 %v2331, %v2324
    %v2486 = vpack.c.b16 %v2332, %v2325
    %v2487 = vpack.c.b16 %v2333, %v2326
    %v2488 = vpack.c.b16 %v2334, %v2327
    %v2489 = vpack.c.b16 %v2335, %v2328
    %v2490 = vpack.c.b16 %v2343, %v2336
    %v2491 = vpack.c.b16 %v2344, %v2337
    %v2492 = vpack.c.b16 %v2345, %v2338
    %v2493 = vpack.c.b16 %v2346, %v2339
    %v2494 = vpack.c.b16 %v2347, %v2340
    %v2495 = vpack.c.b16 %v2348, %v2341
    %v2496 = vpack.c.b16 %v2349, %v2342
    %v2497 = vpack.c.b16 %v2357, %v2350
    %v2498 = vpack.c.b16 %v2358, %v2351
    %v2499 = vpack.c.b16 %v2359, %v2352
    %v2500 = vpack.c.b16 %v2360, %v2353
    %v2501 = vpack.c.b16 %v2361, %v2354
    %v2502 = vpack.c.b16 %v2362, %v2355
    %v2503 = vpack.c.b16 %v2363, %v2356
    %v2504 = vpack.c.b16 %v2371, %v2364
    %v2505 = vpack.c.b16 %v2372, %v2365
    %v2506 = vpack.c.b16 %v2373, %v2366
    %v2507 = vpack.c.b16 %v2374, %v2367
    %v2508 = vpack.c.b16 %v2375, %v2368
    %v2509 = vpack.c.b16 %v2376, %v2369
    %v2510 = vpack.c.b16 %v2377, %v2370
    %v2511 = vpack.c.b16 %v2385, %v2378
    %v2512 = vpack.c.b16 %v2386, %v2379
    %v2513 = vpack.c.b16 %v2387, %v2380
    %v2514 = vpack.c.b16 %v2388, %v2381
    %v2515 = vpack.c.b16 %v2389, %v2382
    %v2516 = vpack.c.b16 %v2390, %v2383
    %v2517 = vpack.c.b16 %v2391, %v2384
    %v2518 = vpack.c.b16 %v2399, %v2392
    %v2519 = vpack.c.b16 %v2400, %v2393
    %v2520 = vpack.c.b16 %v2401, %v2394
    %v2521 = vpack.c.b16 %v2402, %v2395
    %v2522 = vpack.c.b16 %v2403, %v2396
    %v2523 = vpack.c.b16 %v2404, %v2397
    %v2524 = vpack.c.b16 %v2405, %v2398
    %v2525 = vpack.c.b16 %v2413, %v2406
    %v2526 = vpack.c.b16 %v2414, %v2407
    %v2527 = vpack.c.b16 %v2415, %v2408
    %v2528 = vpack.c.b16 %v2416, %v2409
    %v2529 = vpack.c.b16 %v2417, %v2410
    %v2530 = vpack.c.b16 %v2418, %v2411
    %v2531 = vpack.c.b16 %v2419, %v2412
    %2644 = vmatprep.subr.bf16.mxu0 %v2421
    %2645 = vmatpush1.bf16.msra.mxu0 %v2420
    %2646 = vmatprep.subr.bf16.mxu0 %v2428
    %2647 = vmatpush1.bf16.msra.mxu0 %v2427
    %2648 = vmatprep.subr.bf16.mxu0 %v2435
    %2649 = vmatpush1.bf16.msra.mxu0 %v2434
    %2650 = vmatprep.subr.bf16.mxu0 %v2442
    %2651 = vmatpush1.bf16.msra.mxu0 %v2441
    %2652 = vmatprep.subr.bf16.mxu0 %v2449
    %2653 = vmatpush1.bf16.msra.mxu0 %v2448
    %2654 = vmatprep.subr.bf16.mxu0 %v2456
    %2655 = vmatpush1.bf16.msra.mxu0 %v2455
    %2656 = vmatprep.subr.bf16.mxu0 %v2463
    %2657 = vmatpush1.bf16.msra.mxu0 %v2462
    %2658 = vmatprep.subr.bf16.mxu0 %v2470
    %2659 = vmatpush1.bf16.msra.mxu0 %v2469
    %2660 = vmatprep.subr.bf16.mxu0 %v2477
    %2661 = vmatpush1.bf16.msra.mxu0 %v2476
    %2662 = vmatprep.subr.bf16.mxu0 %v2484
    %2663 = vmatpush1.bf16.msra.mxu0 %v2483
    %2664 = vmatprep.subr.bf16.mxu0 %v2491
    %2665 = vmatpush1.bf16.msra.mxu0 %v2490
    %2666 = vmatprep.subr.bf16.mxu0 %v2498
    %2667 = vmatpush1.bf16.msra.mxu0 %v2497
    %2668 = vmatprep.subr.bf16.mxu0 %v2505
    %2669 = vmatpush1.bf16.msra.mxu0 %v2504
    %2670 = vmatprep.subr.bf16.mxu0 %v2512
    %2671 = vmatpush1.bf16.msra.mxu0 %v2511
    %2672 = vmatprep.subr.bf16.mxu0 %v2519
    %2673 = vmatpush1.bf16.msra.mxu0 %v2518
    %2674 = vmatprep.subr.bf16.mxu0 %v2526
    %2675 = vmatpush1.bf16.msra.mxu0 %v2525
    %2676 = vmatprep.mubr.bf16.mxu0 %v1902
    %2677 = vmatmul.mubr.bf16.gmra.mrb[0].mxu0 %v1901
    %v2678 = vpop.f32.mrb[0].mxu0
    %v2679 = vadd.f32 %v2036, %v2678
    %v2680 = vpop.f32.mrb[0].mxu0
    %v2681 = vadd.f32 %v2040, %v2680
    %v2682 = vpop.f32.mrb[0].mxu0
    %v2683 = vpop.f32.mrb[0].mxu0
    %2684 = vdwg.mxu0
    %2685 = vmatprep.subr.bf16.mxu0 %v2423
    %2686 = vmatpush1.bf16.msra.mxu0 %v2422
    %2687 = vmatprep.subr.bf16.mxu0 %v2430
    %2688 = vmatpush1.bf16.msra.mxu0 %v2429
    %2689 = vmatprep.subr.bf16.mxu0 %v2437
    %2690 = vmatpush1.bf16.msra.mxu0 %v2436
    %2691 = vmatprep.subr.bf16.mxu0 %v2444
    %2692 = vmatpush1.bf16.msra.mxu0 %v2443
    %2693 = vmatprep.subr.bf16.mxu0 %v2451
    %2694 = vmatpush1.bf16.msra.mxu0 %v2450
    %2695 = vmatprep.subr.bf16.mxu0 %v2458
    %2696 = vmatpush1.bf16.msra.mxu0 %v2457
    %2697 = vmatprep.subr.bf16.mxu0 %v2465
    %2698 = vmatpush1.bf16.msra.mxu0 %v2464
    %2699 = vmatprep.subr.bf16.mxu0 %v2472
    %2700 = vmatpush1.bf16.msra.mxu0 %v2471
    %2701 = vmatprep.subr.bf16.mxu0 %v2479
    %2702 = vmatpush1.bf16.msra.mxu0 %v2478
    %2703 = vmatprep.subr.bf16.mxu0 %v2486
    %2704 = vmatpush1.bf16.msra.mxu0 %v2485
    %2705 = vmatprep.subr.bf16.mxu0 %v2493
    %2706 = vmatpush1.bf16.msra.mxu0 %v2492
    %2707 = vmatprep.subr.bf16.mxu0 %v2500
    %2708 = vmatpush1.bf16.msra.mxu0 %v2499
    %2709 = vmatprep.subr.bf16.mxu0 %v2507
    %2710 = vmatpush1.bf16.msra.mxu0 %v2506
    %2711 = vmatprep.subr.bf16.mxu0 %v2514
    %2712 = vmatpush1.bf16.msra.mxu0 %v2513
    %2713 = vmatprep.subr.bf16.mxu0 %v2521
    %2714 = vmatpush1.bf16.msra.mxu0 %v2520
    %2715 = vmatprep.subr.bf16.mxu0 %v2528
    %2716 = vmatpush1.bf16.msra.mxu0 %v2527
    %2717 = vmatprep.mubr.bf16.mxu0 %v1902
    %2718 = vmatmul.mubr.bf16.gmra.mrb[0].mxu0 %v1901
    %v2719 = vpop.f32.mrb[0].mxu0
    %v2720 = vadd.f32 %v2044, %v2719
    %v2721 = vpop.f32.mrb[0].mxu0
    %v2722 = vadd.f32 %v2048, %v2721
    %v2723 = vpop.f32.mrb[0].mxu0
    %v2724 = vpop.f32.mrb[0].mxu0
    %2725 = vdwg.mxu0
    %2726 = vmatprep.subr.bf16.mxu0 %v2425
    %2727 = vmatpush1.bf16.msra.mxu0 %v2424
    %2728 = vmatprep.subr.bf16.mxu0 %v2432
    %2729 = vmatpush1.bf16.msra.mxu0 %v2431
    %2730 = vmatprep.subr.bf16.mxu0 %v2439
    %2731 = vmatpush1.bf16.msra.mxu0 %v2438
    %2732 = vmatprep.subr.bf16.mxu0 %v2446
    %2733 = vmatpush1.bf16.msra.mxu0 %v2445
    %2734 = vmatprep.subr.bf16.mxu0 %v2453
    %2735 = vmatpush1.bf16.msra.mxu0 %v2452
    %2736 = vmatprep.subr.bf16.mxu0 %v2460
    %2737 = vmatpush1.bf16.msra.mxu0 %v2459
    %2738 = vmatprep.subr.bf16.mxu0 %v2467
    %2739 = vmatpush1.bf16.msra.mxu0 %v2466
    %2740 = vmatprep.subr.bf16.mxu0 %v2474
    %2741 = vmatpush1.bf16.msra.mxu0 %v2473
    %2742 = vmatprep.subr.bf16.mxu0 %v2481
    %2743 = vmatpush1.bf16.msra.mxu0 %v2480
    %2744 = vmatprep.subr.bf16.mxu0 %v2488
    %2745 = vmatpush1.bf16.msra.mxu0 %v2487
    %2746 = vmatprep.subr.bf16.mxu0 %v2495
    %2747 = vmatpush1.bf16.msra.mxu0 %v2494
    %2748 = vmatprep.subr.bf16.mxu0 %v2502
    %2749 = vmatpush1.bf16.msra.mxu0 %v2501
    %2750 = vmatprep.subr.bf16.mxu0 %v2509
    %2751 = vmatpush1.bf16.msra.mxu0 %v2508
    %2752 = vmatprep.subr.bf16.mxu0 %v2516
    %2753 = vmatpush1.bf16.msra.mxu0 %v2515
    %2754 = vmatprep.subr.bf16.mxu0 %v2523
    %2755 = vmatpush1.bf16.msra.mxu0 %v2522
    %2756 = vmatprep.subr.bf16.mxu0 %v2530
    %2757 = vmatpush1.bf16.msra.mxu0 %v2529
    %2758 = vmatprep.mubr.bf16.mxu0 %v1902
    %2759 = vmatmul.mubr.bf16.gmra.mrb[0].mxu0 %v1901
    %v2760 = vpop.f32.mrb[0].mxu0
    %v2761 = vadd.f32 %v2052, %v2760
    %v2762 = vpop.f32.mrb[0].mxu0
    %v2763 = vadd.f32 %v2056, %v2762
    %v2764 = vpop.f32.mrb[0].mxu0
    %v2765 = vpop.f32.mrb[0].mxu0
    %2766 = vdwg.mxu0
    %2767 = vmatprep.subr.bf16.mxu0 0
    %2768 = vmatpush1.bf16.msra.mxu0 %v2426
    %2769 = vmatprep.subr.bf16.mxu0 0
    %2770 = vmatpush1.bf16.msra.mxu0 %v2433
    %2771 = vmatprep.subr.bf16.mxu0 0
    %2772 = vmatpush1.bf16.msra.mxu0 %v2440
    %2773 = vmatprep.subr.bf16.mxu0 0
    %2774 = vmatpush1.bf16.msra.mxu0 %v2447
    %2775 = vmatprep.subr.bf16.mxu0 0
    %2776 = vmatpush1.bf16.msra.mxu0 %v2454
    %2777 = vmatprep.subr.bf16.mxu0 0
    %2778 = vmatpush1.bf16.msra.mxu0 %v2461
    %2779 = vmatprep.subr.bf16.mxu0 0
    %2780 = vmatpush1.bf16.msra.mxu0 %v2468
    %2781 = vmatprep.subr.bf16.mxu0 0
    %2782 = vmatpush1.bf16.msra.mxu0 %v2475
    %2783 = vmatprep.subr.bf16.mxu0 0
    %2784 = vmatpush1.bf16.msra.mxu0 %v2482
    %2785 = vmatprep.subr.bf16.mxu0 0
    %2786 = vmatpush1.bf16.msra.mxu0 %v2489
    %2787 = vmatprep.subr.bf16.mxu0 0
    %2788 = vmatpush1.bf16.msra.mxu0 %v2496
    %2789 = vmatprep.subr.bf16.mxu0 0
    %2790 = vmatpush1.bf16.msra.mxu0 %v2503
    %2791 = vmatprep.subr.bf16.mxu0 0
    %2792 = vmatpush1.bf16.msra.mxu0 %v2510
    %2793 = vmatprep.subr.bf16.mxu0 0
    %2794 = vmatpush1.bf16.msra.mxu0 %v2517
    %2795 = vmatprep.subr.bf16.mxu0 0
    %2796 = vmatpush1.bf16.msra.mxu0 %v2524
    %2797 = vmatprep.subr.bf16.mxu0 0
    %2798 = vmatpush1.bf16.msra.mxu0 %v2531
    %2799 = vmatprep.mubr.bf16.mxu0 %v1902
    %2800 = vmatmul.mubr.bf16.gmra.mrb[0].mxu0 %v1901
    %v2801 = vpop.f32.mrb[0].mxu0
    %v2802 = vadd.f32 %v2060, %v2801
    %v2803 = vpop.f32.mrb[0].mxu0
    %v2804 = vpop.f32.mrb[0].mxu0
    %v2805 = vpop.f32.mrb[0].mxu0
    %2806 = vdwg.mxu0
    %v2807 = vxor.u32 %v2679, 2147483648
    %v2808 = vxor.u32 %v2681, 2147483648
    %v2809 = vxor.u32 %v2720, 2147483648
    %v2810 = vxor.u32 %v2722, 2147483648
    %v2811 = vxor.u32 %v2761, 2147483648
    %v2812 = vxor.u32 %v2763, 2147483648
    %v2813 = vxor.u32 %v2802, 2147483648
    %v2814 = vmul.f32 %v2807, 1.442695
    %v2815 = vpow.pop %v2814
    %v2816 = vmul.f32 %v2808, 1.442695
    %v2817 = vpow.pop %v2816
    %v2818 = vmul.f32 %v2809, 1.442695
    %v2819 = vpow.pop %v2818
    %v2820 = vmul.f32 %v2810, 1.442695
    %v2821 = vpow.pop %v2820
    %v2822 = vmul.f32 %v2811, 1.442695
    %v2823 = vpow.pop %v2822
    %v2824 = vmul.f32 %v2812, 1.442695
    %v2825 = vpow.pop %v2824
    %v2826 = vmul.f32 %v2813, 1.442695
    %v2827 = vpow.pop %v2826
    %v2828 = vadd.f32 %v2815, 1.0
    %v2829 = vadd.f32 %v2817, 1.0
    %v2830 = vadd.f32 %v2819, 1.0
    %v2831 = vadd.f32 %v2821, 1.0
    %v2832 = vadd.f32 %v2823, 1.0
    %v2833 = vadd.f32 %v2825, 1.0
    %v2834 = vadd.f32 %v2827, 1.0
    %v2835 = vrcp.pop %v2828
    %v2836 = vmul.f32 1.0, %v2835
    %v2837 = vrcp.pop %v2829
    %v2838 = vmul.f32 1.0, %v2837
    %v2839 = vrcp.pop %v2830
    %v2840 = vmul.f32 1.0, %v2839
    %v2841 = vrcp.pop %v2831
    %v2842 = vmul.f32 1.0, %v2841
    %v2843 = vrcp.pop %v2832
    %v2844 = vmul.f32 1.0, %v2843
    %v2845 = vrcp.pop %v2833
    %v2846 = vmul.f32 1.0, %v2845
    %v2847 = vrcp.pop %v2834
    %v2848 = vmul.f32 1.0, %v2847
    %2849 = vst [vmem:[%s14] sm:$0xff] %v2836
    %2850 = vst [vmem:[%s14 + $0x8] sm:$0xff] %v2838
    %2851 = vst [vmem:[%s14 + $0x10] sm:$0xff] %v2840
    %2852 = vst [vmem:[%s14 + $0x18] sm:$0xff] %v2842
    %2853 = vst [vmem:[%s14 + $0x20] sm:$0xff] %v2844
    %2854 = vst [vmem:[%s14 + $0x28] sm:$0xff] %v2846
    %2855 = vst [vmem:[%s14 + $0x30] sm:$0xff] %v2848
    // Predicated region
    $region78: #{linear_vae_forward.1} parent=1 // pred_check
      _
    $region79: #{linear_vae_forward.1} parent=1 // pred_check_branch
      %2857 = sbr.rel (0) target = $region81
    $region80: #{linear_vae_forward.1} parent=1 // pred_region
      _
    $region81: #{linear_vae_forward.1} parent=1 // pred_fallthru
      _
    // Predicated region
    $region82: #{linear_vae_forward.1} parent=1 // pred_check
      _
    $region83: #{linear_vae_forward.1} parent=1 // pred_check_branch
      %2859 = sbr.rel (0) target = $region85
    $region84: #{linear_vae_forward.1} parent=1 // pred_region
      _
    $region85: #{linear_vae_forward.1} parent=1 // pred_fallthru
      _
    // Predicated region
    $region86: #{linear_vae_forward.1} parent=1 // pred_check
      _
    $region87: #{linear_vae_forward.1} parent=1 // pred_check_branch
      %2861 = sbr.rel (0) target = $region89
    $region88: #{linear_vae_forward.1} parent=1 // pred_region
      _
    $region89: #{linear_vae_forward.1} parent=1 // pred_fallthru
      _
    // Predicated region
    $region90: #{linear_vae_forward.1} parent=1 // pred_check
      _
    $region91: #{linear_vae_forward.1} parent=1 // pred_check_branch
      %2863 = sbr.rel (0) target = $region93
    $region92: #{linear_vae_forward.1} parent=1 // pred_region
      _
    $region93: #{linear_vae_forward.1} parent=1 // pred_fallthru
      _
    // Predicated region
    $region94: #{linear_vae_forward.1} parent=1 // pred_check
      _
    $region95: #{linear_vae_forward.1} parent=1 // pred_check_branch
      %2865 = sbr.rel (0) target = $region97
    $region96: #{linear_vae_forward.1} parent=1 // pred_region
      _
    $region97: #{linear_vae_forward.1} parent=1 // pred_fallthru
      _
    // Predicated region
    $region98: #{linear_vae_forward.1} parent=1 // pred_check
      _
    $region99: #{linear_vae_forward.1} parent=1 // pred_check_branch
      %2867 = sbr.rel (0) target = $region101
    $region100: #{linear_vae_forward.1} parent=1 // pred_region
      _
    $region101: #{linear_vae_forward.1} parent=1 // pred_fallthru
      _
    %2868 = vsyncpa [#allocation3], 1
    %2869 = vsyncpa [#allocation5], 1
    %2870 = vsyncpa [#allocation8], 1

</llo_original>
